<compile_context>
chip_gen: v7x
topology: tpu7x:2x2x1
jax: 0.10.0
libtpu: 0.0.40
codegen_flags: <defaults>
</compile_context>

<pallas_src>
import math
import jax
import jax.numpy as jnp
from jax.experimental import pallas as pl
from jax.experimental.pallas import tpu as pltpu


_EXACT_SIGMOID = False   # flip to True for a bit-accurate sigmoid when validating numerics


def _sigmoid(logit):
    if _EXACT_SIGMOID:
        return jax.nn.sigmoid(logit)
    return pl.reciprocal(1.0 + jnp.exp(-logit), approx=True)   # EUP path, nearly free


def _leaky(v):
    return jnp.where(v > 0, v, 0.2 * v)                        # LeakyReLU(0.2)


# --------------------------------------------------------------------------
# Pallas kernels
# --------------------------------------------------------------------------

def _attention_kernel(x_ref, w1_ref, vec_ref, b2_ref, out_ref):
    """sigmoid(leaky_relu(x @ W1 + b1, 0.2) . w2 + b2) per row (downsampled scales 2/4)."""
    x = x_ref[...]                                             # (TP, C) bf16
    vec = vec_ref[...]                                         # (2, Ch) f32: [b1 ; w2_row]
    b1 = vec[0:1, :]
    w2r = vec[1:2, :]
    h = jnp.dot(x, w1_ref[...], preferred_element_type=jnp.float32) + b1
    h = _leaky(h)
    # tiny (TP,Ch)@(Ch,1) contraction on the VPU/XLU instead of a wasted MXU push
    logit = jnp.sum(h * w2r, axis=-1, keepdims=True) + b2_ref[0]
    # (TP,1) output kept f32: this stream is 1/4+1/16 resolution, negligible HBM traffic.
    out_ref[...] = _sigmoid(logit)


def _fusion_kernel(x_ref, a24_ref, w1_ref, vec_ref, b2_ref, wf_ref, bf_ref, out_ref):
    """Fused:  a1 = spatial_attention(x)   (scale-1 map, never hits HBM)
               out = leaky_relu(a1*(x@Wf1) + a2*(x@Wf2) + a4*(x@Wf3) + bf, 0.2)  in bf16.
       Uses (a_i * x) @ Wf_i == a_i * (x @ Wf_i) since a_i is a per-row scalar; three
       accumulated (TP,C)@(C,C) dots avoid any (TP,3C) f32 intermediate."""
    x = x_ref[...]                                             # (TP, C) bf16

    # ---- scale-1 attention MLP (fused) ----
    vec = vec_ref[...]                                         # (2, Ch) f32
    b1 = vec[0:1, :]
    w2r = vec[1:2, :]
    h = jnp.dot(x, w1_ref[...], preferred_element_type=jnp.float32) + b1
    h = _leaky(h)
    logit = jnp.sum(h * w2r, axis=-1, keepdims=True) + b2_ref[0]
    a1 = _sigmoid(logit)                                       # (TP, 1) f32

    # ---- upsampled scale-2 / scale-4 maps (one narrow bf16 stream) ----
    a24 = a24_ref[...].astype(jnp.float32)                     # (TP, 2)
    a2 = a24[:, 0:1]
    a4 = a24[:, 1:2]

    # ---- fused 1x1 conv over concat(a1*x, a2*x, a4*x) ----
    z = a1 * jnp.dot(x, wf_ref[0], preferred_element_type=jnp.float32)
    z = z + a2 * jnp.dot(x, wf_ref[1], preferred_element_type=jnp.float32)
    z = z + a4 * jnp.dot(x, wf_ref[2], preferred_element_type=jnp.float32)
    z = z + bf_ref[...]
    out_ref[...] = _leaky(z).astype(out_ref.dtype)             # bf16 store


# --------------------------------------------------------------------------
# Tiling helpers (lane-padding-aware VMEM model, generation-aware limit)
# --------------------------------------------------------------------------

def _round_up(x, m):
    return ((x + m - 1) // m) * m


def _lane_pad(w):
    """Width a block's last dim occupies in VMEM (padded to 128 lanes)."""
    return _round_up(max(int(w), 1), 128)


def _vmem_limit_bytes():
    """Generation-aware scoped-VMEM limit: half of physical VMEM, capped at 64 MiB
    (=> ~32 MiB on v7x's 64 MiB VMEM, 64 MiB on v5e/v6e's 128 MiB)."""
    try:
        cap = int(pltpu.get_tpu_info().vmem_capacity_bytes)
    except Exception:
        cap = 64 << 20
    return max(16 << 20, min(64 << 20, cap // 2))


_VMEM_LIMIT = _vmem_limit_bytes()


def _attention_row_bytes(c, ch):
    """Per-row VMEM footprint of the attention kernel (lane-padded, double-buffered I/O)."""
    io = 2 * (2 * _lane_pad(c)) + 2 * (4 * 128)          # x bf16 + (TP,1) f32 out (padded to 128 lanes)
    live = 4 * (_lane_pad(ch) + 128)                     # h f32 + logit column
    return io + live


def _fusion_row_bytes(c, ch):
    """Per-row VMEM footprint of the fusion kernel."""
    io = 2 * (2 * _lane_pad(c)) + 2 * (2 * _lane_pad(2)) + 2 * (2 * _lane_pad(c))  # x, a24, out (bf16)
    live = 4 * (2 * _lane_pad(c) + _lane_pad(ch) + 2 * 128)                        # z + dot temp + h + a1/logit
    return io + live


def _row_tile(p, row_bytes, vmem_limit):
    """Row tile: multiple of 128; per-row footprint fits ~3/4 of the scoped limit
    (rest is weights/compiler scratch); capped at 4096 rows; clamped to ~P/4 so the
    'parallel' grid axis has >=4 steps (>=2 per TensorCore on v7x)."""
    budget = (3 * vmem_limit) // 4
    by_budget = max(128, (budget // max(row_bytes, 1)) // 128 * 128)
    quarter = _round_up(max(p // 4, 1), 128)
    return max(128, min(4096, by_budget, quarter))


# --------------------------------------------------------------------------
# pallas_call wrappers (ragged grids: no padding / slicing round-trips)
# --------------------------------------------------------------------------

def spatial_attention_pallas(x_flat, w1, vec, b2):
    """x_flat: (P, C) bf16 -> (P, 1) f32 attention map (scales 2 and 4, batched rows)."""
    P, C = x_flat.shape
    Ch = w1.shape[1]
    TP = _row_tile(P, _attention_row_bytes(C, Ch), _VMEM_LIMIT)
    return pl.pallas_call(
        _attention_kernel,
        out_shape=jax.ShapeDtypeStruct((P, 1), jnp.float32),
        grid=(pl.cdiv(P, TP),),
        in_specs=[
            pl.BlockSpec((TP, C), lambda i: (i, 0)),
            pl.BlockSpec((C, Ch), lambda i: (0, 0)),
            pl.BlockSpec((2, Ch), lambda i: (0, 0)),
            pl.BlockSpec(memory_space=pltpu.MemorySpace.SMEM),
        ],
        out_specs=pl.BlockSpec((TP, 1), lambda i: (i, 0)),
        compiler_params=pltpu.CompilerParams(
            dimension_semantics=("parallel",),
            vmem_limit_bytes=_VMEM_LIMIT),
    )(x_flat, w1, vec, b2)


def fusion_pallas(x_flat, a24, w1, vec, b2, wf, bf):
    """x_flat: (P, C) bf16; a24: (P, 2) bf16 (upsampled scale-2/4 maps);
    w1: (C, Ch) bf16; vec: (2, Ch) f32 [b1; w2_row]; b2: (1,) f32 (SMEM);
    wf: (3, C, C) bf16; bf: (1, C) f32  ->  (P, C) bf16."""
    P, C = x_flat.shape
    Ch = w1.shape[1]
    TP = _row_tile(P, _fusion_row_bytes(C, Ch), _VMEM_LIMIT)
    return pl.pallas_call(
        _fusion_kernel,
        out_shape=jax.ShapeDtypeStruct((P, C), jnp.bfloat16),
        grid=(pl.cdiv(P, TP),),
        in_specs=[
            pl.BlockSpec((TP, C), lambda i: (i, 0)),
            pl.BlockSpec((TP, 2), lambda i: (i, 0)),
            pl.BlockSpec((C, Ch), lambda i: (0, 0)),
            pl.BlockSpec((2, Ch), lambda i: (0, 0)),
            pl.BlockSpec(memory_space=pltpu.MemorySpace.SMEM),
            pl.BlockSpec((3, C, C), lambda i: (0, 0, 0)),
            pl.BlockSpec((1, C), lambda i: (0, 0)),
        ],
        out_specs=pl.BlockSpec((TP, C), lambda i: (i, 0)),
        compiler_params=pltpu.CompilerParams(
            dimension_semantics=("parallel",),
            vmem_limit_bytes=_VMEM_LIMIT),
    )(x_flat, a24, w1, vec, b2, wf, bf)


# --------------------------------------------------------------------------
# Bilinear resize glue (PyTorch F.interpolate, mode='bilinear',
# align_corners=False, antialias=False) as separable interpolation matrices.
# --------------------------------------------------------------------------

def bilinear_matrix(in_size, out_size):
    scale = in_size / out_size
    dst = jnp.arange(out_size, dtype=jnp.float32)
    src = (dst + 0.5) * scale - 0.5
    src = jnp.maximum(src, 0.0)                     # PyTorch clamps negatives to 0
    i0 = jnp.clip(jnp.floor(src).astype(jnp.int32), 0, in_size - 1)
    i1 = jnp.minimum(i0 + 1, in_size - 1)
    w1 = jnp.clip(src - i0.astype(jnp.float32), 0.0, 1.0)
    w0 = 1.0 - w1
    m = jnp.zeros((out_size, in_size), jnp.float32)
    m = m.at[jnp.arange(out_size), i0].add(w0)
    m = m.at[jnp.arange(out_size), i1].add(w1)
    return m


def resize_nhwc(x, rh, rw):
    # x: (N, H, W, C) (f32 or bf16); rh: (Ho, H); rw: (Wo, W); f32 accumulation.
    y = jnp.einsum("oh,nhwc->nowc", rh, x, preferred_element_type=jnp.float32)
    y = jnp.einsum("pw,nowc->nopc", rw, y, preferred_element_type=jnp.float32)
    return y


# --------------------------------------------------------------------------
# Module forward
# --------------------------------------------------------------------------

SCALES = (1, 2, 4)


def init_params(key, channels):
    ch_hidden = channels // 8
    k1, k2, k3, k4, k5, k6 = jax.random.split(key, 6)
    # Conv2d(C, C//8, 1) weight (O, I), Conv2d(C//8, 1, 1), Conv2d(3C, C, 1)
    w1 = 0.1 * jax.random.normal(k1, (ch_hidden, channels), jnp.float32)
    b1 = 0.1 * jax.random.normal(k2, (ch_hidden,), jnp.float32)
    w2 = 0.1 * jax.random.normal(k3, (1, ch_hidden), jnp.float32)
    b2 = 0.1 * jax.random.normal(k4, (1,), jnp.float32)
    wf = 0.1 * jax.random.normal(k5, (channels, channels * len(SCALES)), jnp.float32)
    bf = 0.1 * jax.random.normal(k6, (channels,), jnp.float32)
    return dict(w1=w1, b1=b1, w2=w2, b2=b2, wf=wf, bf=bf)


def multi_scale_spatial_attention(x_nchw, params):
    N, C, H, W = x_nchw.shape

    # bf16 NHWC master copy: all full-resolution glue (transpose, resizes, kernel DMA)
    # moves half the bytes; all accumulation stays in f32.
    x_bf = jnp.transpose(x_nchw, (0, 2, 3, 1)).astype(jnp.bfloat16)     # (N, H, W, C)

    # matmul weights in bf16 (MXU-native, half the HBM bytes); biases / VPU math in f32
    w1t = params["w1"].T.astype(jnp.bfloat16)                           # (C, C//8)
    vec = jnp.stack([params["b1"], params["w2"][0]], axis=0).astype(jnp.float32)  # (2, C//8)
    b2 = params["b2"].reshape(1).astype(jnp.float32)                    # (1,) SMEM scalar
    wf = params["wf"].T.reshape(len(SCALES), C, C).astype(jnp.bfloat16)  # (3, C, C): wf[i] = Wf_i
    bfr = params["bf"].reshape(1, -1).astype(jnp.float32)               # (1, C)

    # Attention maps for scales 2 and 4: downsample, run ONE batched Pallas call over the
    # concatenated rows, upsample, and pack into a single narrow (P, 2) bf16 stream.
    sizes, xs = [], []
    for scale in (2, 4):
        ho = int(math.floor(H * (1.0 / scale)))
        wo = int(math.floor(W * (1.0 / scale)))
        xr = resize_nhwc(x_bf, bilinear_matrix(H, ho), bilinear_matrix(W, wo))
        xs.append(xr.reshape(-1, C).astype(jnp.bfloat16))
        sizes.append((ho, wo))
    x_att = jnp.concatenate(xs, axis=0)                                 # (P/4 + P/16, C) bf16
    att = spatial_attention_pallas(x_att, w1t, vec, b2)                 # (P/4 + P/16, 1) f32
    p2 = N * sizes[0][0] * sizes[0][1]
    att2 = att[:p2].reshape(N, sizes[0][0], sizes[0][1], 1)
    att4 = att[p2:].reshape(N, sizes[1][0], sizes[1][1], 1)
    a2_up = resize_nhwc(att2, bilinear_matrix(sizes[0][0], H), bilinear_matrix(sizes[0][1], W))
    a4_up = resize_nhwc(att4, bilinear_matrix(sizes[1][0], H), bilinear_matrix(sizes[1][1], W))
    a24 = jnp.concatenate([a2_up.reshape(-1, 1), a4_up.reshape(-1, 1)],
                          axis=1).astype(jnp.bfloat16)                  # (N*H*W, 2) bf16

    # Scale-1 attention is fused inside the fusion kernel (no full-res map in HBM);
    # fusion output is bf16 and converted to f32 only at the module boundary.
    out_flat = fusion_pallas(x_bf.reshape(-1, C), a24, w1t, vec, b2, wf, bfr)   # (P, C) bf16
    out = out_flat.reshape(N, H, W, C)
    return jnp.transpose(out, (0, 3, 1, 2)).astype(jnp.float32)         # back to NCHW, f32


# --------------------------------------------------------------------------
# Pure-JAX f32 reference (structurally different path: explicit concat + single
# (P,3C)@(3C,C) matmul, separate scale-1 attention) for a consistency check.
# TODO(synk): PyTorch F.interpolate parity of bilinear_matrix is not independently
#             validated here (same resize matrices reused by both paths).
# --------------------------------------------------------------------------

def reference_forward(x_nchw, params):
    N, C, H, W = x_nchw.shape
    x = jnp.transpose(x_nchw, (0, 2, 3, 1)).astype(jnp.float32)

    def att_mlp(feat_flat):
        h = _leaky(feat_flat @ params["w1"].T + params["b1"])
        return jax.nn.sigmoid(h @ params["w2"].T + params["b2"])

    feats = []
    for scale in SCALES:
        if scale == 1:
            xr = x
        else:
            ho = int(math.floor(H * (1.0 / scale)))
            wo = int(math.floor(W * (1.0 / scale)))
            xr = resize_nhwc(x, bilinear_matrix(H, ho), bilinear_matrix(W, wo))
        Nr, Hr, Wr, _ = xr.shape
        att = att_mlp(xr.reshape(-1, C)).reshape(Nr, Hr, Wr, 1)
        if scale != 1:
            att = resize_nhwc(att, bilinear_matrix(Hr, H), bilinear_matrix(Wr, W))
        feats.append(att * x)
    cat = jnp.concatenate(feats, axis=-1)                               # (N,H,W,3C)
    out = _leaky(cat.reshape(-1, 3 * C) @ params["wf"].T + params["bf"])
    return jnp.transpose(out.reshape(N, H, W, C), (0, 3, 1, 2))


# --------------------------------------------------------------------------

if __name__ == "__main__":
    key = jax.random.PRNGKey(0)
    kx, kp = jax.random.split(key)

    N, C, H, W = 2, 16, 16, 16            # channels=16 so channels//8 = 2
    x = jax.random.normal(kx, (N, C, H, W), jnp.float32)
    params = init_params(kp, C)

    fwd = jax.jit(multi_scale_spatial_attention)
    out = jax.block_until_ready(fwd(x, params))

    ref = jax.block_until_ready(reference_forward(x, params))
    assert out.shape == (N, C, H, W)
    # bf16 kernel inputs/outputs + approx-reciprocal sigmoid vs f32 reference -> relaxed tolerance
    assert jnp.allclose(out, ref, atol=5e-2, rtol=5e-2), "Pallas output mismatch vs reference"

    print("KERNEL_OK")
</pallas_src>

<mosaic_0001>
module attributes {stable_mosaic.version = 11 : i64} {
  func.func private @main(%arg0: i32) attributes {dimension_semantics = [#tpu.dimension_semantics<core_parallel>], iteration_bounds = array<i64: 2>, tpu.core_type = #tpu.core_type<sc_scalar_subcore>, window_params = []} {
    return
  }
}

module attributes {stable_mosaic.version = 11 : i64} {
  func.func private @main(%arg0: i32) attributes {dimension_semantics = [#tpu.dimension_semantics<core_parallel>], iteration_bounds = array<i64: 2>, tpu.core_type = #tpu.core_type<sc_scalar_subcore>, window_params = []} {
    return
  }
}

module attributes {stable_mosaic.version = 11 : i64} {
  func.func @_attention_kernel(%arg0: i32, %arg1: memref<128x16xbf16, #tpu.memory_space<vmem>>, %arg2: memref<16x2xbf16, #tpu.memory_space<vmem>>, %arg3: memref<2x2xf32, #tpu.memory_space<vmem>>, %arg4: memref<1xf32, #tpu.memory_space<smem>>, %arg5: memref<128x1xf32, #tpu.memory_space<vmem>>) attributes {dimension_semantics = [#tpu.dimension_semantics<parallel>], iteration_bounds = array<i64: 2>, scalar_prefetch = 0 : i64, scratch_operands = 0 : i64, tpu.core_type = #tpu.core_type<tc>, window_params = [{transform_indices = @transform_0, window_bounds = array<i64: 128, 16>}, {pipeline_mode = #tpu.pipeline_mode<synchronous>, transform_indices = @transform_1, window_bounds = array<i64: 16, 2>}, {pipeline_mode = #tpu.pipeline_mode<synchronous>, transform_indices = @transform_2, window_bounds = array<i64: 2, 2>}, {transform_indices = @transform_3, window_bounds = array<i64: 1>}, {transform_indices = @transform_4, window_bounds = array<i64: 128, 1>}]} {
    %c0 = arith.constant 0 : index
    %c0_0 = arith.constant 0 : index
    %0 = vector.load %arg1[%c0, %c0_0] : memref<128x16xbf16, #tpu.memory_space<vmem>>, vector<128x16xbf16>
    %c0_1 = arith.constant 0 : index
    %c0_2 = arith.constant 0 : index
    %1 = vector.load %arg3[%c0_1, %c0_2] : memref<2x2xf32, #tpu.memory_space<vmem>>, vector<2x2xf32>
    %2 = vector.extract_strided_slice %1 {offsets = [0, 0], sizes = [1, 2], strides = [1, 1]} : vector<2x2xf32> to vector<1x2xf32>
    %3 = vector.extract_strided_slice %1 {offsets = [1, 0], sizes = [1, 2], strides = [1, 1]} : vector<2x2xf32> to vector<1x2xf32>
    %c0_3 = arith.constant 0 : index
    %c0_4 = arith.constant 0 : index
    %4 = vector.load %arg2[%c0_3, %c0_4] : memref<16x2xbf16, #tpu.memory_space<vmem>>, vector<16x2xbf16>
    %cst = arith.constant dense<0.000000e+00> : vector<128x2xf32>
    %5 = tpu.matmul %0, %4, %cst {dimension_numbers = #tpu.dot_dimension_numbers<[1], [0], [0], [1], [0, 0, 1, 1], [], []>} : vector<128x16xbf16>, vector<16x2xbf16>, vector<128x2xf32> -> vector<128x2xf32>
    %6 = vector.broadcast %2 : vector<1x2xf32> to vector<128x2xf32>
    %7 = arith.addf %5, %6 : vector<128x2xf32>
    %cst_5 = arith.constant 0.000000e+00 : f32
    %8 = vector.broadcast %cst_5 : f32 to vector<128x2xf32>
    %9 = arith.cmpf ogt, %7, %8 : vector<128x2xf32>
    %cst_6 = arith.constant 2.000000e-01 : f32
    %10 = vector.broadcast %cst_6 : f32 to vector<128x2xf32>
    %11 = arith.mulf %10, %7 : vector<128x2xf32>
    %12 = arith.select %9, %7, %11 : vector<128x2xi1>, vector<128x2xf32>
    %13 = vector.broadcast %3 : vector<1x2xf32> to vector<128x2xf32>
    %14 = arith.mulf %12, %13 : vector<128x2xf32>
    %cst_7 = arith.constant dense<0.000000e+00> : vector<128xf32>
    %15 = vector.multi_reduction <add>, %14, %cst_7 [1] : vector<128x2xf32> to vector<128xf32>
    %16 = vector.shape_cast %15 : vector<128xf32> to vector<128x1xf32>
    %c0_8 = arith.constant 0 : index
    %17 = memref.load %arg4[%c0_8] : memref<1xf32, #tpu.memory_space<smem>>
    %18 = vector.broadcast %17 : f32 to vector<128x1xf32>
    %19 = arith.addf %16, %18 : vector<128x1xf32>
    %cst_9 = arith.constant 0.000000e+00 : f32
    %20 = vector.broadcast %cst_9 : f32 to vector<128x1xf32>
    %21 = arith.subf %20, %19 : vector<128x1xf32>
    %22 = math.exp %21 : vector<128x1xf32>
    %cst_10 = arith.constant 1.000000e+00 : f32
    %23 = vector.broadcast %cst_10 : f32 to vector<128x1xf32>
    %24 = arith.addf %23, %22 : vector<128x1xf32>
    %25 = tpu.reciprocal %24 {approx = true} : vector<128x1xf32> -> vector<128x1xf32>
    %c0_11 = arith.constant 0 : index
    %c0_12 = arith.constant 0 : index
    %26 = vector.load %arg5[%c0_11, %c0_12] : memref<128x1xf32, #tpu.memory_space<vmem>>, vector<128x1xf32>
    tpu.vector_store %arg5[%c0_11, %c0_12], %25 {strides = array<i32>} : memref<128x1xf32, #tpu.memory_space<vmem>>, vector<128x1xf32>,
    return
  }
  func.func @transform_0(%arg0: i32) -> (i32, i32) {
    %c0_i32 = arith.constant 0 : i32
    %c0_i32_0 = arith.constant 0 : i32
    return %arg0, %c0_i32 : i32, i32
  }
  func.func @transform_1(%arg0: i32) -> (i32, i32) {
    %c0_i32 = arith.constant 0 : i32
    %c0_i32_0 = arith.constant 0 : i32
    %c0_i32_1 = arith.constant 0 : i32
    return %c0_i32, %c0_i32_0 : i32, i32
  }
  func.func @transform_2(%arg0: i32) -> (i32, i32) {
    %c0_i32 = arith.constant 0 : i32
    %c0_i32_0 = arith.constant 0 : i32
    %c0_i32_1 = arith.constant 0 : i32
    return %c0_i32, %c0_i32_0 : i32, i32
  }
  func.func @transform_3(%arg0: i32) -> i32 {
    %c0_i32 = arith.constant 0 : i32
    %c0_i32_0 = arith.constant 0 : i32
    return %c0_i32 : i32
  }
  func.func @transform_4(%arg0: i32) -> (i32, i32) {
    %c0_i32 = arith.constant 0 : i32
    %c0_i32_0 = arith.constant 0 : i32
    return %arg0, %c0_i32 : i32, i32
  }
}

module attributes {stable_mosaic.version = 11 : i64} {
  func.func @_fusion_kernel(%arg0: i32, %arg1: memref<128x16xbf16, #tpu.memory_space<vmem>>, %arg2: memref<128x2xbf16, #tpu.memory_space<vmem>>, %arg3: memref<16x2xbf16, #tpu.memory_space<vmem>>, %arg4: memref<2x2xf32, #tpu.memory_space<vmem>>, %arg5: memref<1xf32, #tpu.memory_space<smem>>, %arg6: memref<3x16x16xbf16, #tpu.memory_space<vmem>>, %arg7: memref<1x16xf32, #tpu.memory_space<vmem>>, %arg8: memref<128x16xbf16, #tpu.memory_space<vmem>>) attributes {dimension_semantics = [#tpu.dimension_semantics<parallel>], iteration_bounds = array<i64: 4>, scalar_prefetch = 0 : i64, scratch_operands = 0 : i64, tpu.core_type = #tpu.core_type<tc>, window_params = [{transform_indices = @transform_0, window_bounds = array<i64: 128, 16>}, {transform_indices = @transform_1, window_bounds = array<i64: 128, 2>}, {pipeline_mode = #tpu.pipeline_mode<synchronous>, transform_indices = @transform_2, window_bounds = array<i64: 16, 2>}, {pipeline_mode = #tpu.pipeline_mode<synchronous>, transform_indices = @transform_3, window_bounds = array<i64: 2, 2>}, {transform_indices = @transform_4, window_bounds = array<i64: 1>}, {pipeline_mode = #tpu.pipeline_mode<synchronous>, transform_indices = @transform_5, window_bounds = array<i64: 3, 16, 16>}, {pipeline_mode = #tpu.pipeline_mode<synchronous>, transform_indices = @transform_6, window_bounds = array<i64: 1, 16>}, {transform_indices = @transform_7, window_bounds = array<i64: 128, 16>}]} {
    %c0 = arith.constant 0 : index
    %c0_0 = arith.constant 0 : index
    %0 = vector.load %arg1[%c0, %c0_0] : memref<128x16xbf16, #tpu.memory_space<vmem>>, vector<128x16xbf16>
    %c0_1 = arith.constant 0 : index
    %c0_2 = arith.constant 0 : index
    %1 = vector.load %arg4[%c0_1, %c0_2] : memref<2x2xf32, #tpu.memory_space<vmem>>, vector<2x2xf32>
    %2 = vector.extract_strided_slice %1 {offsets = [0, 0], sizes = [1, 2], strides = [1, 1]} : vector<2x2xf32> to vector<1x2xf32>
    %3 = vector.extract_strided_slice %1 {offsets = [1, 0], sizes = [1, 2], strides = [1, 1]} : vector<2x2xf32> to vector<1x2xf32>
    %c0_3 = arith.constant 0 : index
    %c0_4 = arith.constant 0 : index
    %4 = vector.load %arg3[%c0_3, %c0_4] : memref<16x2xbf16, #tpu.memory_space<vmem>>, vector<16x2xbf16>
    %cst = arith.constant dense<0.000000e+00> : vector<128x2xf32>
    %5 = tpu.matmul %0, %4, %cst {dimension_numbers = #tpu.dot_dimension_numbers<[1], [0], [0], [1], [0, 0, 1, 1], [], []>} : vector<128x16xbf16>, vector<16x2xbf16>, vector<128x2xf32> -> vector<128x2xf32>
    %6 = vector.broadcast %2 : vector<1x2xf32> to vector<128x2xf32>
    %7 = arith.addf %5, %6 : vector<128x2xf32>
    %cst_5 = arith.constant 0.000000e+00 : f32
    %8 = vector.broadcast %cst_5 : f32 to vector<128x2xf32>
    %9 = arith.cmpf ogt, %7, %8 : vector<128x2xf32>
    %cst_6 = arith.constant 2.000000e-01 : f32
    %10 = vector.broadcast %cst_6 : f32 to vector<128x2xf32>
    %11 = arith.mulf %10, %7 : vector<128x2xf32>
    %12 = arith.select %9, %7, %11 : vector<128x2xi1>, vector<128x2xf32>
    %13 = vector.broadcast %3 : vector<1x2xf32> to vector<128x2xf32>
    %14 = arith.mulf %12, %13 : vector<128x2xf32>
    %cst_7 = arith.constant dense<0.000000e+00> : vector<128xf32>
    %15 = vector.multi_reduction <add>, %14, %cst_7 [1] : vector<128x2xf32> to vector<128xf32>
    %16 = vector.shape_cast %15 : vector<128xf32> to vector<128x1xf32>
    %c0_8 = arith.constant 0 : index
    %17 = memref.load %arg5[%c0_8] : memref<1xf32, #tpu.memory_space<smem>>
    %18 = vector.broadcast %17 : f32 to vector<128x1xf32>
    %19 = arith.addf %16, %18 : vector<128x1xf32>
    %cst_9 = arith.constant 0.000000e+00 : f32
    %20 = vector.broadcast %cst_9 : f32 to vector<128x1xf32>
    %21 = arith.subf %20, %19 : vector<128x1xf32>
    %22 = math.exp %21 : vector<128x1xf32>
    %cst_10 = arith.constant 1.000000e+00 : f32
    %23 = vector.broadcast %cst_10 : f32 to vector<128x1xf32>
    %24 = arith.addf %23, %22 : vector<128x1xf32>
    %25 = tpu.reciprocal %24 {approx = true} : vector<128x1xf32> -> vector<128x1xf32>
    %c0_11 = arith.constant 0 : index
    %c0_12 = arith.constant 0 : index
    %26 = vector.load %arg2[%c0_11, %c0_12] : memref<128x2xbf16, #tpu.memory_space<vmem>>, vector<128x2xbf16>
    %27 = arith.extf %26 : vector<128x2xbf16> to vector<128x2xf32>
    %28 = vector.extract_strided_slice %27 {offsets = [0, 0], sizes = [128, 1], strides = [1, 1]} : vector<128x2xf32> to vector<128x1xf32>
    %29 = vector.extract_strided_slice %27 {offsets = [0, 1], sizes = [128, 1], strides = [1, 1]} : vector<128x2xf32> to vector<128x1xf32>
    %c0_13 = arith.constant 0 : index
    %c0_14 = arith.constant 0 : index
    %c0_15 = arith.constant 0 : index
    %30 = vector.load %arg6[%c0_13, %c0_14, %c0_15] : memref<3x16x16xbf16, #tpu.memory_space<vmem>>, vector<1x16x16xbf16>
    %31 = vector.shape_cast %30 : vector<1x16x16xbf16> to vector<16x16xbf16>
    %cst_16 = arith.constant dense<0.000000e+00> : vector<128x16xf32>
    %32 = tpu.matmul %0, %31, %cst_16 {dimension_numbers = #tpu.dot_dimension_numbers<[1], [0], [0], [1], [0, 0, 1, 1], [], []>} : vector<128x16xbf16>, vector<16x16xbf16>, vector<128x16xf32> -> vector<128x16xf32>
    %33 = vector.broadcast %25 : vector<128x1xf32> to vector<128x16xf32>
    %34 = arith.mulf %33, %32 : vector<128x16xf32>
    %c1 = arith.constant 1 : index
    %c0_17 = arith.constant 0 : index
    %c0_18 = arith.constant 0 : index
    %35 = vector.load %arg6[%c1, %c0_17, %c0_18] : memref<3x16x16xbf16, #tpu.memory_space<vmem>>, vector<1x16x16xbf16>
    %36 = vector.shape_cast %35 : vector<1x16x16xbf16> to vector<16x16xbf16>
    %cst_19 = arith.constant dense<0.000000e+00> : vector<128x16xf32>
    %37 = tpu.matmul %0, %36, %cst_19 {dimension_numbers = #tpu.dot_dimension_numbers<[1], [0], [0], [1], [0, 0, 1, 1], [], []>} : vector<128x16xbf16>, vector<16x16xbf16>, vector<128x16xf32> -> vector<128x16xf32>
    %38 = vector.broadcast %28 : vector<128x1xf32> to vector<128x16xf32>
    %39 = arith.mulf %38, %37 : vector<128x16xf32>
    %40 = arith.addf %34, %39 : vector<128x16xf32>
    %c2 = arith.constant 2 : index
    %c0_20 = arith.constant 0 : index
    %c0_21 = arith.constant 0 : index
    %41 = vector.load %arg6[%c2, %c0_20, %c0_21] : memref<3x16x16xbf16, #tpu.memory_space<vmem>>, vector<1x16x16xbf16>
    %42 = vector.shape_cast %41 : vector<1x16x16xbf16> to vector<16x16xbf16>
    %cst_22 = arith.constant dense<0.000000e+00> : vector<128x16xf32>
    %43 = tpu.matmul %0, %42, %cst_22 {dimension_numbers = #tpu.dot_dimension_numbers<[1], [0], [0], [1], [0, 0, 1, 1], [], []>} : vector<128x16xbf16>, vector<16x16xbf16>, vector<128x16xf32> -> vector<128x16xf32>
    %44 = vector.broadcast %29 : vector<128x1xf32> to vector<128x16xf32>
    %45 = arith.mulf %44, %43 : vector<128x16xf32>
    %46 = arith.addf %40, %45 : vector<128x16xf32>
    %c0_23 = arith.constant 0 : index
    %c0_24 = arith.constant 0 : index
    %47 = vector.load %arg7[%c0_23, %c0_24] : memref<1x16xf32, #tpu.memory_space<vmem>>, vector<1x16xf32>
    %48 = vector.broadcast %47 : vector<1x16xf32> to vector<128x16xf32>
    %49 = arith.addf %46, %48 : vector<128x16xf32>
    %cst_25 = arith.constant 0.000000e+00 : f32
    %50 = vector.broadcast %cst_25 : f32 to vector<128x16xf32>
    %51 = arith.cmpf ogt, %49, %50 : vector<128x16xf32>
    %cst_26 = arith.constant 2.000000e-01 : f32
    %52 = vector.broadcast %cst_26 : f32 to vector<128x16xf32>
    %53 = arith.mulf %52, %49 : vector<128x16xf32>
    %54 = arith.select %51, %49, %53 : vector<128x16xi1>, vector<128x16xf32>
    %55 = arith.truncf %54 : vector<128x16xf32> to vector<128x16xbf16>
    %c0_27 = arith.constant 0 : index
    %c0_28 = arith.constant 0 : index
    %56 = vector.load %arg8[%c0_27, %c0_28] : memref<128x16xbf16, #tpu.memory_space<vmem>>, vector<128x16xbf16>
    tpu.vector_store %arg8[%c0_27, %c0_28], %55 {strides = array<i32>} : memref<128x16xbf16, #tpu.memory_space<vmem>>, vector<128x16xbf16>,
    return
  }
  func.func @transform_0(%arg0: i32) -> (i32, i32) {
    %c0_i32 = arith.constant 0 : i32
    %c0_i32_0 = arith.constant 0 : i32
    return %arg0, %c0_i32 : i32, i32
  }
  func.func @transform_1(%arg0: i32) -> (i32, i32) {
    %c0_i32 = arith.constant 0 : i32
    %c0_i32_0 = arith.constant 0 : i32
    return %arg0, %c0_i32 : i32, i32
  }
  func.func @transform_2(%arg0: i32) -> (i32, i32) {
    %c0_i32 = arith.constant 0 : i32
    %c0_i32_0 = arith.constant 0 : i32
    %c0_i32_1 = arith.constant 0 : i32
    return %c0_i32, %c0_i32_0 : i32, i32
  }
  func.func @transform_3(%arg0: i32) -> (i32, i32) {
    %c0_i32 = arith.constant 0 : i32
    %c0_i32_0 = arith.constant 0 : i32
    %c0_i32_1 = arith.constant 0 : i32
    return %c0_i32, %c0_i32_0 : i32, i32
  }
  func.func @transform_4(%arg0: i32) -> i32 {
    %c0_i32 = arith.constant 0 : i32
    %c0_i32_0 = arith.constant 0 : i32
    return %c0_i32 : i32
  }
  func.func @transform_5(%arg0: i32) -> (i32, i32, i32) {
    %c0_i32 = arith.constant 0 : i32
    %c0_i32_0 = arith.constant 0 : i32
    %c0_i32_1 = arith.constant 0 : i32
    %c0_i32_2 = arith.constant 0 : i32
    return %c0_i32, %c0_i32_0, %c0_i32_1 : i32, i32, i32
  }
  func.func @transform_6(%arg0: i32) -> (i32, i32) {
    %c0_i32 = arith.constant 0 : i32
    %c0_i32_0 = arith.constant 0 : i32
    %c0_i32_1 = arith.constant 0 : i32
    return %c0_i32, %c0_i32_0 : i32, i32
  }
  func.func @transform_7(%arg0: i32) -> (i32, i32) {
    %c0_i32 = arith.constant 0 : i32
    %c0_i32_0 = arith.constant 0 : i32
    return %arg0, %c0_i32 : i32, i32
  }
}

</mosaic_0001>

<llo_original>
// kernel: multi_scale_spatial_attention.2
$region0: #{multi_scale_spatial_attention.2}
  #allocation0 [shape = 'u32[]', space=smem, size = 0x4, offset = 0x4, fixed_abs, tag = 'smem constant byte address 0x4 - core index']
  #allocation1 [shape = 'u32[144,128]{1,0:T(1,128)}', space=vmem, size = 0x12000, scoped, tag = 'internal scratch']
  #allocation2 [shape = 'f32[1]{0:T(128)S(6)}', space=smem, size = 0x200, scoped, tag = 'scoped memory for multi_scale_spatial_attention.2']
  %s0 = inlined_call_operand.vmem [shape: bf16[160,16], index: 0, kind: input, shape index: {}]
  %s1 = inlined_call_operand.vmem [shape: bf16[16,2], index: 1, kind: input, shape index: {}]
  %s2 = inlined_call_operand.vmem [shape: f32[2,2], index: 2, kind: input, shape index: {}]
  %s3 = inlined_call_operand.<no memory space> [shape: f32[1], index: 3, kind: input, shape index: {}]
  %s4 = inlined_call_operand.vmem [shape: f32[160,1], index: 4, kind: output, shape index: {}]
  %s5 = sld [smem:[#allocation0]]
  $region97: #{multi_scale_spatial_attention.2} parent=0
    _
  %s7 = ssub.s32 1, %s5
  %s8 = scalar_select 0, %s7, %s5
  %9 = sst [smem:[#allocation2]] %s3
  $region1: #{multi_scale_spatial_attention.2} parent=0
    #allocation3 [shape = 'u8[131072]{0}', space=vmem, size = 0x20000, scoped, tag = 'output window, operand 0']
    loop: start=0, step=1, limit=4
    $region2: #{multi_scale_spatial_attention.2} parent=1 // loop_pre_header
      _
    $region3: #{multi_scale_spatial_attention.2} parent=1 // loop_header
      %s11 = sphi 0, %s15
      %p12 = scmp.ge.s32.totalorder %s11, 4
      %s21 = sphi 0, %s23
      %s24 = sphi 0, %s21
      %s25 = sphi 0, %s24
      %s41 = sphi 0, %s25
      %s45 = sphi 0, %s45
      %s47 = sphi 0, %s45
      %s48 = sphi 0, %s47
      %s62 = sphi 0, %s48
      %s66 = sphi 0, %s66
      %s68 = sphi 0, %s66
      %s69 = sphi 0, %s68
      %s83 = sphi 0, %s69
      %s87 = sphi 0, %s87
      %s89 = sphi 0, %s87
      %s90 = sphi 0, %s89
      %s104 = sphi 0, %s90
      %s110 = sphi 0, %s112
      %s113 = sphi 0, %s110
      %s114 = sphi 0, %s113
      %s130 = sphi 0, %s114
    $region4: #{multi_scale_spatial_attention.2} parent=1 // loop_header_branch
      %14 = sbr.rel (%p12) target = $region8
    $region5: #{multi_scale_spatial_attention.2} parent=1 // loop_body
      %s16 = ssub.s32 %s11, 1
      %s17 = ssub.s32 %s11, 2
      %s18 = sadd.s32 %s11, 1
      %s19 = ssub.s32 %s11, %s18
      %p20 = scmp.eq.s32.totalorder %s19, 0
      %s22 = sadd.s32 %s21, 1
      %s23 = scalar_select %p20, %s21, %s22
      %p26 = pneg %p20
      %p27 = scmp.eq.s32.totalorder %s11, 1
      %p28 = por %p26, %p27
      %p29 = scmp.ne.s32.totalorder %s21, %s24
      %p30 = scmp.eq.s32.totalorder %s11, 0
      %p31 = por %p29, %p30
      %p32 = scmp.ne.s32.totalorder %s21, %s24
      %p33 = scmp.eq.s32.totalorder %s16, 1
      %p34 = por %p32, %p33
      %p35 = scmp.ne.s32.totalorder %s24, %s25
      %p36 = scmp.eq.s32.totalorder %s16, 0
      %p37 = por %p35, %p36
      %p38 = scmp.ne.s32.totalorder %s24, %s25
      %p39 = scmp.eq.s32.totalorder %s17, 1
      %p40 = por %p38, %p39
      %p42 = scmp.ne.s32.totalorder %s25, %s41
      %p43 = scmp.eq.s32.totalorder %s17, 0
      %p44 = por %p42, %p43
      %s46 = sadd.s32 %s45, 1
      %p49 = scmp.eq.s32.totalorder %s11, 1
      %p50 = scmp.ne.s32.totalorder %s45, %s47
      %p51 = scmp.eq.s32.totalorder %s11, 0
      %p52 = por %p50, %p51
      %p53 = scmp.ne.s32.totalorder %s45, %s47
      %p54 = scmp.eq.s32.totalorder %s16, 1
      %p55 = por %p53, %p54
      %p56 = scmp.ne.s32.totalorder %s47, %s48
      %p57 = scmp.eq.s32.totalorder %s16, 0
      %p58 = por %p56, %p57
      %p59 = scmp.ne.s32.totalorder %s47, %s48
      %p60 = scmp.eq.s32.totalorder %s17, 1
      %p61 = por %p59, %p60
      %p63 = scmp.ne.s32.totalorder %s48, %s62
      %p64 = scmp.eq.s32.totalorder %s17, 0
      %p65 = por %p63, %p64
      %s67 = sadd.s32 %s66, 1
      %p70 = scmp.eq.s32.totalorder %s11, 1
      %p71 = scmp.ne.s32.totalorder %s66, %s68
      %p72 = scmp.eq.s32.totalorder %s11, 0
      %p73 = por %p71, %p72
      %p74 = scmp.ne.s32.totalorder %s66, %s68
      %p75 = scmp.eq.s32.totalorder %s16, 1
      %p76 = por %p74, %p75
      %p77 = scmp.ne.s32.totalorder %s68, %s69
      %p78 = scmp.eq.s32.totalorder %s16, 0
      %p79 = por %p77, %p78
      %p80 = scmp.ne.s32.totalorder %s68, %s69
      %p81 = scmp.eq.s32.totalorder %s17, 1
      %p82 = por %p80, %p81
      %p84 = scmp.ne.s32.totalorder %s69, %s83
      %p85 = scmp.eq.s32.totalorder %s17, 0
      %p86 = por %p84, %p85
      %s88 = sadd.s32 %s87, 1
      %p91 = scmp.eq.s32.totalorder %s11, 1
      %p92 = scmp.ne.s32.totalorder %s87, %s89
      %p93 = scmp.eq.s32.totalorder %s11, 0
      %p94 = por %p92, %p93
      %p95 = scmp.ne.s32.totalorder %s87, %s89
      %p96 = scmp.eq.s32.totalorder %s16, 1
      %p97 = por %p95, %p96
      %p98 = scmp.ne.s32.totalorder %s89, %s90
      %p99 = scmp.eq.s32.totalorder %s16, 0
      %p100 = por %p98, %p99
      %p101 = scmp.ne.s32.totalorder %s89, %s90
      %p102 = scmp.eq.s32.totalorder %s17, 1
      %p103 = por %p101, %p102
      %p105 = scmp.ne.s32.totalorder %s90, %s104
      %p106 = scmp.eq.s32.totalorder %s17, 0
      %p107 = por %p105, %p106
      %s108 = ssub.s32 %s11, %s18
      %p109 = scmp.eq.s32.totalorder %s108, 0
      %s111 = sadd.s32 %s110, 1
      %s112 = scalar_select %p109, %s110, %s111
      %p115 = pneg %p109
      %p116 = scmp.eq.s32.totalorder %s11, 1
      %p117 = por %p115, %p116
      %p118 = scmp.ne.s32.totalorder %s110, %s113
      %p119 = scmp.eq.s32.totalorder %s11, 0
      %p120 = por %p118, %p119
      %p121 = scmp.ne.s32.totalorder %s110, %s113
      %p122 = scmp.eq.s32.totalorder %s16, 1
      %p123 = por %p121, %p122
      %p124 = scmp.ne.s32.totalorder %s113, %s114
      %p125 = scmp.eq.s32.totalorder %s16, 0
      %p126 = por %p124, %p125
      %p127 = scmp.ne.s32.totalorder %s113, %s114
      %p128 = scmp.eq.s32.totalorder %s17, 1
      %p129 = por %p127, %p128
      %p131 = scmp.ne.s32.totalorder %s114, %s130
      %p132 = scmp.eq.s32.totalorder %s17, 0
      %p133 = por %p131, %p132
      %p134 = scmp.le.s32.totalorder 1, %s11
      %p135 = scmp.lt.s32.totalorder %s11, 3
      %p136 = pnand %p134, %p135
      %p137 = pneg %p136
      // Predicated region
      $region9: #{multi_scale_spatial_attention.2} parent=5 // pred_check
        _
      $region10: #{multi_scale_spatial_attention.2} parent=5 // pred_check_branch
        %139 = sbr.rel (%p136) target = $region12
      $region11: #{multi_scale_spatial_attention.2} parent=5 // pred_region
        %s140 = ssub.s32 %s11, 1
        // Predicated region
        $region13: #{multi_scale_spatial_attention.2} parent=11 // pred_check
          %p141 = pneg %p58
        $region14: #{multi_scale_spatial_attention.2} parent=11 // pred_check_branch
          %143 = sbr.rel (%p141) target = $region16
        $region15: #{multi_scale_spatial_attention.2} parent=11 // pred_region
          _
        $region16: #{multi_scale_spatial_attention.2} parent=11 // pred_fallthru
          _
        // Predicated region
        $region17: #{multi_scale_spatial_attention.2} parent=11 // pred_check
          %p144 = pneg %p79
        $region18: #{multi_scale_spatial_attention.2} parent=11 // pred_check_branch
          %146 = sbr.rel (%p144) target = $region20
        $region19: #{multi_scale_spatial_attention.2} parent=11 // pred_region
          _
        $region20: #{multi_scale_spatial_attention.2} parent=11 // pred_fallthru
          _
        // Predicated region
        $region21: #{multi_scale_spatial_attention.2} parent=11 // pred_check
          %p147 = pneg %p100
        $region22: #{multi_scale_spatial_attention.2} parent=11 // pred_check_branch
          %149 = sbr.rel (%p147) target = $region24
        $region23: #{multi_scale_spatial_attention.2} parent=11 // pred_region
          _
        $region24: #{multi_scale_spatial_attention.2} parent=11 // pred_fallthru
          _
      $region12: #{multi_scale_spatial_attention.2} parent=5 // pred_fallthru
        _
      %p150 = scmp.lt.s32.totalorder %s11, 2
      // Predicated region
      $region25: #{multi_scale_spatial_attention.2} parent=5 // pred_check
        %p151 = pneg %p150
      $region26: #{multi_scale_spatial_attention.2} parent=5 // pred_check_branch
        %153 = sbr.rel (%p151) target = $region28
      $region27: #{multi_scale_spatial_attention.2} parent=5 // pred_region
        // Predicated region
        $region29: #{multi_scale_spatial_attention.2} parent=27 // pred_check
          %p154 = pneg %p31
        $region30: #{multi_scale_spatial_attention.2} parent=27 // pred_check_branch
          %156 = sbr.rel (%p154) target = $region32
        $region31: #{multi_scale_spatial_attention.2} parent=27 // pred_region
          %s157 = smul.u32 16, %s11
          %s158 = ssub.s32 20, %s157
          %p159 = scmp.lt.s32.totalorder %s158, 16
          %s160 = scalar_select %p159, %s158, 16
          %s161 = smul.u32 64, %s160
          %p162 = scmp.lt.s32.totalorder %s157, 19
          %s163 = scalar_select %p162, %s157, 19
          %s164 = smul.addr %s163, 4
          %s165 = scalar_lea.vmem %s0, %s164
          %s166 = smul.u32 16, %s11
          %s167 = ssub.s32 20, %s166
          %p168 = scmp.lt.s32.totalorder %s167, 16
          %s169 = scalar_select %p168, %s167, 16
          %s170 = smul.u32 64, %s169
        $region32: #{multi_scale_spatial_attention.2} parent=27 // pred_fallthru
          _
      $region28: #{multi_scale_spatial_attention.2} parent=5 // pred_fallthru
        _
      %p171 = scmp.le.s32.totalorder 1, %s11
      %p172 = scmp.lt.s32.totalorder %s11, 3
      %p173 = pnand %p171, %p172
      %p174 = pneg %p173
      // Predicated region
      $region33: #{multi_scale_spatial_attention.2} parent=5 // pred_check
        _
      $region34: #{multi_scale_spatial_attention.2} parent=5 // pred_check_branch
        %176 = sbr.rel (%p173) target = $region36
      $region35: #{multi_scale_spatial_attention.2} parent=5 // pred_region
        %s177 = ssub.s32 %s11, 1
        %s178 = smul.u32 16, %s16
        %s179 = ssub.s32 20, %s178
        %p180 = scmp.lt.s32.totalorder %s179, 16
        %s181 = scalar_select %p180, %s179, 16
        %s182 = smul.u32 64, %s181
        %p183 = scmp.lt.s32.totalorder %s178, 19
        %s184 = scalar_select %p183, %s178, 19
        %s185 = smul.addr %s184, 4
        %s186 = scalar_lea.vmem %s0, %s185
        %p187 = pneg %p37
        %p188 = pneg %p34
        %p189 = pneg %p58
        %p190 = pneg %p55
        %p191 = pneg %p79
        %p192 = pneg %p76
        %p193 = pneg %p100
        %p194 = pneg %p97
        %p195 = pneg %p126
        %p196 = pneg %p123
        %s197 = sand.u32 %s113, 1
        %s198 = sand.u32 %s113, 1
        %s199 = smul.addr %s198, 128
        %s200 = scalar_lea.vmem [#allocation3], %s199
        %s201 = smul.u32 16, %s16
        %s202 = ssub.s32 20, %s201
        %p203 = scmp.lt.s32.totalorder %s202, 16
        %s204 = scalar_select %p203, %s202, 16
        %s205 = smul.u32 64, %s204
        %p206 = scmp.lt.s32.totalorder %s201, 19
        %s207 = scalar_select %p206, %s201, 19
        %s208 = smul.addr %s207, 4
        %s209 = scalar_lea.vmem %s0, %s208
        %s210 = smul.u32 16, %s16
        %s211 = ssub.s32 20, %s210
        %p212 = scmp.lt.s32.totalorder %s211, 16
        %s213 = scalar_select %p212, %s211, 16
        %s214 = smul.u32 64, %s213
        %s215 = smul.u32 16, %s16
        %s216 = ssub.s32 20, %s215
        %p217 = scmp.lt.s32.totalorder %s216, 16
        %s218 = scalar_select %p217, %s216, 16
        %s219 = smul.u32 128, %s218
        %v221 = vld [vmem:[%s209] sm:$0xf]
        %v222 = vld [vmem:[%s209 + $0x4] sm:$0xf]
        %v223 = vld [vmem:[%s209 + $0x8] sm:$0xf]
        %v224 = vld [vmem:[%s209 + $0xc] sm:$0xf]
        %v225 = vld [vmem:[%s209 + $0x10] sm:$0xf]
        %v226 = vld [vmem:[%s209 + $0x14] sm:$0xf]
        %v227 = vld [vmem:[%s209 + $0x18] sm:$0xf]
        %v228 = vld [vmem:[%s209 + $0x1c] sm:$0xf]
        %v229 = vld [vmem:[%s209 + $0x20] sm:$0xf]
        %v230 = vld [vmem:[%s209 + $0x24] sm:$0xf]
        %v231 = vld [vmem:[%s209 + $0x28] sm:$0xf]
        %v232 = vld [vmem:[%s209 + $0x2c] sm:$0xf]
        %v233 = vld [vmem:[%s209 + $0x30] sm:$0xf]
        %v234 = vld [vmem:[%s209 + $0x34] sm:$0xf]
        %v235 = vld [vmem:[%s209 + $0x38] sm:$0xf]
        %v236 = vld [vmem:[%s209 + $0x3c] sm:$0xf]
        %v237 = vld [vmem:[%s2] sm:$0x3]
        %v238 = vld [vmem:[%s1] sm:$0xf]
        %v239 = vld [vmem:[%s1 + $0x4] sm:$0xf]
        %v240 = vlaneseq
        %v241 = vshrl.u32 %v240, 7
        %v242 = vsub.s32 0, %v241
        %v243 = vrot.slane %v237, %v242
        %v260 = vunpack.c.l.b16 %v221
        %v261 = vunpack.c.l.b16 %v222
        %v262 = vunpack.c.l.b16 %v223
        %v263 = vunpack.c.l.b16 %v224
        %v264 = vunpack.c.l.b16 %v225
        %v265 = vunpack.c.l.b16 %v226
        %v266 = vunpack.c.l.b16 %v227
        %v267 = vunpack.c.l.b16 %v228
        %v268 = vunpack.c.l.b16 %v229
        %v269 = vunpack.c.l.b16 %v230
        %v270 = vunpack.c.l.b16 %v231
        %v271 = vunpack.c.l.b16 %v232
        %v272 = vunpack.c.l.b16 %v233
        %v273 = vunpack.c.l.b16 %v234
        %v274 = vunpack.c.l.b16 %v235
        %v275 = vunpack.c.l.b16 %v236
        %v276 = vpack.c.b16 %v261, %v260
        %v277 = vpack.c.b16 %v263, %v262
        %v278 = vpack.c.b16 %v265, %v264
        %v279 = vpack.c.b16 %v267, %v266
        %v280 = vpack.c.b16 %v269, %v268
        %v281 = vpack.c.b16 %v271, %v270
        %v282 = vpack.c.b16 %v273, %v272
        %v283 = vpack.c.b16 %v275, %v274
        %v286 = vunpack.c.l.b16 %v238
        %v287 = vunpack.c.l.b16 %v239
        %v288 = vpack.c.b16 %v287, %v286
        %vm290 = vcmask 130048
        %v292 = vsel %vm290, %v276, 0
        %v295 = vsel %vm290, %v277, 0
        %v298 = vsel %vm290, %v278, 0
        %v301 = vsel %vm290, %v279, 0
        %v304 = vsel %vm290, %v280, 0
        %v307 = vsel %vm290, %v281, 0
        %v310 = vsel %vm290, %v282, 0
        %v313 = vsel %vm290, %v283, 0
        %315 = vmatprep.subr.bf16.mxu0 0
        %316 = vmatpush1.bf16.msra.mxu0 %v288
        %317 = vmatprep.subr.bf16.mxu0 0
        %318 = vmatpush1.bf16.msra.mxu0 0
        %319 = vmatprep.subr.bf16.mxu0 0
        %320 = vmatpush1.bf16.msra.mxu0 0
        %321 = vmatprep.subr.bf16.mxu0 0
        %322 = vmatpush1.bf16.msra.mxu0 0
        %323 = vmatprep.subr.bf16.mxu0 0
        %324 = vmatpush1.bf16.msra.mxu0 0
        %325 = vmatprep.subr.bf16.mxu0 0
        %326 = vmatpush1.bf16.msra.mxu0 0
        %327 = vmatprep.subr.bf16.mxu0 0
        %328 = vmatpush1.bf16.msra.mxu0 0
        %329 = vmatprep.subr.bf16.mxu0 0
        %330 = vmatpush1.bf16.msra.mxu0 0
        %331 = vmatprep.subr.bf16.mxu0 0
        %332 = vmatpush1.bf16.msra.mxu0 0
        %333 = vmatprep.subr.bf16.mxu0 0
        %334 = vmatpush1.bf16.msra.mxu0 0
        %335 = vmatprep.subr.bf16.mxu0 0
        %336 = vmatpush1.bf16.msra.mxu0 0
        %337 = vmatprep.subr.bf16.mxu0 0
        %338 = vmatpush1.bf16.msra.mxu0 0
        %339 = vmatprep.subr.bf16.mxu0 0
        %340 = vmatpush1.bf16.msra.mxu0 0
        %341 = vmatprep.subr.bf16.mxu0 0
        %342 = vmatpush1.bf16.msra.mxu0 0
        %343 = vmatprep.subr.bf16.mxu0 0
        %344 = vmatpush1.bf16.msra.mxu0 0
        %345 = vmatprep.subr.bf16.mxu0 0
        %346 = vmatpush1.bf16.msra.mxu0 0
        %347 = vmatprep.mubr.bf16.mxu0 0
        %348 = vmatmul.mubr.bf16.gmra.mrb[0].mxu0 %v292
        %v349 = vpop.f32.mrb[0].mxu0
        %v350 = vadd.f32 %v243, %v349
        %v351 = vpop.f32.mrb[0].mxu0
        %v352 = vpop.f32.mrb[0].mxu0
        %v353 = vadd.f32 %v243, %v352
        %v354 = vpop.f32.mrb[0].mxu0
        %355 = vmatprep.mubr.bf16.mxu0 0
        %356 = vmatmul.mubr.bf16.gmra.mrb[0].mxu0 %v295
        %v357 = vpop.f32.mrb[0].mxu0
        %v358 = vadd.f32 %v243, %v357
        %v359 = vpop.f32.mrb[0].mxu0
        %v360 = vpop.f32.mrb[0].mxu0
        %v361 = vadd.f32 %v243, %v360
        %v362 = vpop.f32.mrb[0].mxu0
        %363 = vmatprep.mubr.bf16.mxu0 0
        %364 = vmatmul.mubr.bf16.gmra.mrb[0].mxu0 %v298
        %v365 = vpop.f32.mrb[0].mxu0
        %v366 = vadd.f32 %v243, %v365
        %v367 = vpop.f32.mrb[0].mxu0
        %v368 = vpop.f32.mrb[0].mxu0
        %v369 = vadd.f32 %v243, %v368
        %v370 = vpop.f32.mrb[0].mxu0
        %371 = vmatprep.mubr.bf16.mxu0 0
        %372 = vmatmul.mubr.bf16.gmra.mrb[0].mxu0 %v301
        %v373 = vpop.f32.mrb[0].mxu0
        %v374 = vadd.f32 %v243, %v373
        %v375 = vpop.f32.mrb[0].mxu0
        %v376 = vpop.f32.mrb[0].mxu0
        %v377 = vadd.f32 %v243, %v376
        %v378 = vpop.f32.mrb[0].mxu0
        %379 = vmatprep.mubr.bf16.mxu0 0
        %380 = vmatmul.mubr.bf16.gmra.mrb[0].mxu0 %v304
        %v381 = vpop.f32.mrb[0].mxu0
        %v382 = vadd.f32 %v243, %v381
        %v383 = vpop.f32.mrb[0].mxu0
        %v384 = vpop.f32.mrb[0].mxu0
        %v385 = vadd.f32 %v243, %v384
        %v386 = vpop.f32.mrb[0].mxu0
        %387 = vmatprep.mubr.bf16.mxu0 0
        %388 = vmatmul.mubr.bf16.gmra.mrb[0].mxu0 %v307
        %v389 = vpop.f32.mrb[0].mxu0
        %v390 = vadd.f32 %v243, %v389
        %v391 = vpop.f32.mrb[0].mxu0
        %v392 = vpop.f32.mrb[0].mxu0
        %v393 = vadd.f32 %v243, %v392
        %v394 = vpop.f32.mrb[0].mxu0
        %395 = vmatprep.mubr.bf16.mxu0 0
        %396 = vmatmul.mubr.bf16.gmra.mrb[0].mxu0 %v310
        %v397 = vpop.f32.mrb[0].mxu0
        %v398 = vadd.f32 %v243, %v397
        %v399 = vpop.f32.mrb[0].mxu0
        %v400 = vpop.f32.mrb[0].mxu0
        %v401 = vadd.f32 %v243, %v400
        %v402 = vpop.f32.mrb[0].mxu0
        %403 = vmatprep.mubr.bf16.mxu0 0
        %404 = vmatmul.mubr.bf16.gmra.mrb[0].mxu0 %v313
        %v405 = vpop.f32.mrb[0].mxu0
        %v406 = vadd.f32 %v243, %v405
        %v407 = vpop.f32.mrb[0].mxu0
        %v408 = vpop.f32.mrb[0].mxu0
        %v409 = vadd.f32 %v243, %v408
        %v410 = vpop.f32.mrb[0].mxu0
        %411 = vdwg.mxu0
        %vm412 = vcmp.gt.f32.partialorder %v350, 0.0
        %vm413 = vcmp.gt.f32.partialorder %v353, 0.0
        %vm414 = vcmp.gt.f32.partialorder %v358, 0.0
        %vm415 = vcmp.gt.f32.partialorder %v361, 0.0
        %vm416 = vcmp.gt.f32.partialorder %v366, 0.0
        %vm417 = vcmp.gt.f32.partialorder %v369, 0.0
        %vm418 = vcmp.gt.f32.partialorder %v374, 0.0
        %vm419 = vcmp.gt.f32.partialorder %v377, 0.0
        %vm420 = vcmp.gt.f32.partialorder %v382, 0.0
        %vm421 = vcmp.gt.f32.partialorder %v385, 0.0
        %vm422 = vcmp.gt.f32.partialorder %v390, 0.0
        %vm423 = vcmp.gt.f32.partialorder %v393, 0.0
        %vm424 = vcmp.gt.f32.partialorder %v398, 0.0
        %vm425 = vcmp.gt.f32.partialorder %v401, 0.0
        %vm426 = vcmp.gt.f32.partialorder %v406, 0.0
        %vm427 = vcmp.gt.f32.partialorder %v409, 0.0
        %v428 = vmul.f32 %v350, 0.2
        %v429 = vmul.f32 %v353, 0.2
        %v430 = vmul.f32 %v358, 0.2
        %v431 = vmul.f32 %v361, 0.2
        %v432 = vmul.f32 %v366, 0.2
        %v433 = vmul.f32 %v369, 0.2
        %v434 = vmul.f32 %v374, 0.2
        %v435 = vmul.f32 %v377, 0.2
        %v436 = vmul.f32 %v382, 0.2
        %v437 = vmul.f32 %v385, 0.2
        %v438 = vmul.f32 %v390, 0.2
        %v439 = vmul.f32 %v393, 0.2
        %v440 = vmul.f32 %v398, 0.2
        %v441 = vmul.f32 %v401, 0.2
        %v442 = vmul.f32 %v406, 0.2
        %v443 = vmul.f32 %v409, 0.2
        %v444 = vsel %vm412, %v350, %v428
        %v445 = vsel %vm413, %v353, %v429
        %v446 = vsel %vm414, %v358, %v430
        %v447 = vsel %vm415, %v361, %v431
        %v448 = vsel %vm416, %v366, %v432
        %v449 = vsel %vm417, %v369, %v433
        %v450 = vsel %vm418, %v374, %v434
        %v451 = vsel %vm419, %v377, %v435
        %v452 = vsel %vm420, %v382, %v436
        %v453 = vsel %vm421, %v385, %v437
        %v454 = vsel %vm422, %v390, %v438
        %v455 = vsel %vm423, %v393, %v439
        %v456 = vsel %vm424, %v398, %v440
        %v457 = vsel %vm425, %v401, %v441
        %v458 = vsel %vm426, %v406, %v442
        %v459 = vsel %vm427, %v409, %v443
        %v460 = vlaneseq
        %v461 = vshrl.u32 %v460, 7
        %v462 = vsub.s32 1, %v461
        %v463 = vrot.slane %v237, %v462
        %v464 = vmul.f32 %v444, %v463
        %v465 = vmul.f32 %v445, %v463
        %v466 = vmul.f32 %v446, %v463
        %v467 = vmul.f32 %v447, %v463
        %v468 = vmul.f32 %v448, %v463
        %v469 = vmul.f32 %v449, %v463
        %v470 = vmul.f32 %v450, %v463
        %v471 = vmul.f32 %v451, %v463
        %v472 = vmul.f32 %v452, %v463
        %v473 = vmul.f32 %v453, %v463
        %v474 = vmul.f32 %v454, %v463
        %v475 = vmul.f32 %v455, %v463
        %v476 = vmul.f32 %v456, %v463
        %v477 = vmul.f32 %v457, %v463
        %v478 = vmul.f32 %v458, %v463
        %v479 = vmul.f32 %v459, %v463
        %vm480 = vcmask 15360
        %v481 = vsel %vm480, %v464, 0.0
        %482 = vadd.xlane.f32.xlu0 %v481
        %v483 = vpop.xlane.xlu0 %482
        %v484 = vsel %vm480, %v465, 0.0
        %485 = vadd.xlane.f32.xlu0 %v484
        %v486 = vpop.xlane.xlu0 %485
        %v487 = vsel %vm480, %v466, 0.0
        %488 = vadd.xlane.f32.xlu0 %v487
        %v489 = vpop.xlane.xlu0 %488
        %v490 = vsel %vm480, %v467, 0.0
        %491 = vadd.xlane.f32.xlu0 %v490
        %v492 = vpop.xlane.xlu0 %491
        %v493 = vsel %vm480, %v468, 0.0
        %494 = vadd.xlane.f32.xlu0 %v493
        %v495 = vpop.xlane.xlu0 %494
        %v496 = vsel %vm480, %v469, 0.0
        %497 = vadd.xlane.f32.xlu0 %v496
        %v498 = vpop.xlane.xlu0 %497
        %v499 = vsel %vm480, %v470, 0.0
        %500 = vadd.xlane.f32.xlu0 %v499
        %v501 = vpop.xlane.xlu0 %500
        %v502 = vsel %vm480, %v471, 0.0
        %503 = vadd.xlane.f32.xlu0 %v502
        %v504 = vpop.xlane.xlu0 %503
        %v505 = vsel %vm480, %v472, 0.0
        %506 = vadd.xlane.f32.xlu0 %v505
        %v507 = vpop.xlane.xlu0 %506
        %v508 = vsel %vm480, %v473, 0.0
        %509 = vadd.xlane.f32.xlu0 %v508
        %v510 = vpop.xlane.xlu0 %509
        %v511 = vsel %vm480, %v474, 0.0
        %512 = vadd.xlane.f32.xlu0 %v511
        %v513 = vpop.xlane.xlu0 %512
        %v514 = vsel %vm480, %v475, 0.0
        %515 = vadd.xlane.f32.xlu0 %v514
        %v516 = vpop.xlane.xlu0 %515
        %v517 = vsel %vm480, %v476, 0.0
        %518 = vadd.xlane.f32.xlu0 %v517
        %v519 = vpop.xlane.xlu0 %518
        %v520 = vsel %vm480, %v477, 0.0
        %521 = vadd.xlane.f32.xlu0 %v520
        %v522 = vpop.xlane.xlu0 %521
        %v523 = vsel %vm480, %v478, 0.0
        %524 = vadd.xlane.f32.xlu0 %v523
        %v525 = vpop.xlane.xlu0 %524
        %v526 = vsel %vm480, %v479, 0.0
        %527 = vadd.xlane.f32.xlu0 %v526
        %v528 = vpop.xlane.xlu0 %527
        %s529 = sld [smem:[#allocation2]]
        %v530 = vstv %s529
        %v531 = vadd.f32 %v483, %v530
        %v532 = vadd.f32 %v486, %v530
        %v533 = vadd.f32 %v489, %v530
        %v534 = vadd.f32 %v492, %v530
        %v535 = vadd.f32 %v495, %v530
        %v536 = vadd.f32 %v498, %v530
        %v537 = vadd.f32 %v501, %v530
        %v538 = vadd.f32 %v504, %v530
        %v539 = vadd.f32 %v507, %v530
        %v540 = vadd.f32 %v510, %v530
        %v541 = vadd.f32 %v513, %v530
        %v542 = vadd.f32 %v516, %v530
        %v543 = vadd.f32 %v519, %v530
        %v544 = vadd.f32 %v522, %v530
        %v545 = vadd.f32 %v525, %v530
        %v546 = vadd.f32 %v528, %v530
        %v547 = vsub.f32 0.0, %v531
        %v548 = vsub.f32 0.0, %v532
        %v549 = vsub.f32 0.0, %v533
        %v550 = vsub.f32 0.0, %v534
        %v551 = vsub.f32 0.0, %v535
        %v552 = vsub.f32 0.0, %v536
        %v553 = vsub.f32 0.0, %v537
        %v554 = vsub.f32 0.0, %v538
        %v555 = vsub.f32 0.0, %v539
        %v556 = vsub.f32 0.0, %v540
        %v557 = vsub.f32 0.0, %v541
        %v558 = vsub.f32 0.0, %v542
        %v559 = vsub.f32 0.0, %v543
        %v560 = vsub.f32 0.0, %v544
        %v561 = vsub.f32 0.0, %v545
        %v562 = vsub.f32 0.0, %v546
        %v563 = vmul.f32 %v547, 1.442695
        %v564 = vpow.pop %v563
        %v565 = vmul.f32 %v548, 1.442695
        %v566 = vpow.pop %v565
        %v567 = vmul.f32 %v549, 1.442695
        %v568 = vpow.pop %v567
        %v569 = vmul.f32 %v550, 1.442695
        %v570 = vpow.pop %v569
        %v571 = vmul.f32 %v551, 1.442695
        %v572 = vpow.pop %v571
        %v573 = vmul.f32 %v552, 1.442695
        %v574 = vpow.pop %v573
        %v575 = vmul.f32 %v553, 1.442695
        %v576 = vpow.pop %v575
        %v577 = vmul.f32 %v554, 1.442695
        %v578 = vpow.pop %v577
        %v579 = vmul.f32 %v555, 1.442695
        %v580 = vpow.pop %v579
        %v581 = vmul.f32 %v556, 1.442695
        %v582 = vpow.pop %v581
        %v583 = vmul.f32 %v557, 1.442695
        %v584 = vpow.pop %v583
        %v585 = vmul.f32 %v558, 1.442695
        %v586 = vpow.pop %v585
        %v587 = vmul.f32 %v559, 1.442695
        %v588 = vpow.pop %v587
        %v589 = vmul.f32 %v560, 1.442695
        %v590 = vpow.pop %v589
        %v591 = vmul.f32 %v561, 1.442695
        %v592 = vpow.pop %v591
        %v593 = vmul.f32 %v562, 1.442695
        %v594 = vpow.pop %v593
        %v595 = vadd.f32 %v564, 1.0
        %v596 = vadd.f32 %v566, 1.0
        %v597 = vadd.f32 %v568, 1.0
        %v598 = vadd.f32 %v570, 1.0
        %v599 = vadd.f32 %v572, 1.0
        %v600 = vadd.f32 %v574, 1.0
        %v601 = vadd.f32 %v576, 1.0
        %v602 = vadd.f32 %v578, 1.0
        %v603 = vadd.f32 %v580, 1.0
        %v604 = vadd.f32 %v582, 1.0
        %v605 = vadd.f32 %v584, 1.0
        %v606 = vadd.f32 %v586, 1.0
        %v607 = vadd.f32 %v588, 1.0
        %v608 = vadd.f32 %v590, 1.0
        %v609 = vadd.f32 %v592, 1.0
        %v610 = vadd.f32 %v594, 1.0
        %v611 = vrcp.pop %v595
        %v612 = vrcp.pop %v596
        %v613 = vrcp.pop %v597
        %v614 = vrcp.pop %v598
        %v615 = vrcp.pop %v599
        %v616 = vrcp.pop %v600
        %v617 = vrcp.pop %v601
        %v618 = vrcp.pop %v602
        %v619 = vrcp.pop %v603
        %v620 = vrcp.pop %v604
        %v621 = vrcp.pop %v605
        %v622 = vrcp.pop %v606
        %v623 = vrcp.pop %v607
        %v624 = vrcp.pop %v608
        %v625 = vrcp.pop %v609
        %v626 = vrcp.pop %v610
        %vm627 = vcmask 7168
        %628 = vst.msk [vmem:[%s200] sm:$0xff] %vm627, %v611
        %629 = vst.msk [vmem:[%s200 + $0x8] sm:$0xff] %vm627, %v612
        %630 = vst.msk [vmem:[%s200 + $0x10] sm:$0xff] %vm627, %v613
        %631 = vst.msk [vmem:[%s200 + $0x18] sm:$0xff] %vm627, %v614
        %632 = vst.msk [vmem:[%s200 + $0x20] sm:$0xff] %vm627, %v615
        %633 = vst.msk [vmem:[%s200 + $0x28] sm:$0xff] %vm627, %v616
        %634 = vst.msk [vmem:[%s200 + $0x30] sm:$0xff] %vm627, %v617
        %635 = vst.msk [vmem:[%s200 + $0x38] sm:$0xff] %vm627, %v618
        %636 = vst.msk [vmem:[%s200 + $0x40] sm:$0xff] %vm627, %v619
        %637 = vst.msk [vmem:[%s200 + $0x48] sm:$0xff] %vm627, %v620
        %638 = vst.msk [vmem:[%s200 + $0x50] sm:$0xff] %vm627, %v621
        %639 = vst.msk [vmem:[%s200 + $0x58] sm:$0xff] %vm627, %v622
        %640 = vst.msk [vmem:[%s200 + $0x60] sm:$0xff] %vm627, %v623
        %641 = vst.msk [vmem:[%s200 + $0x68] sm:$0xff] %vm627, %v624
        %642 = vst.msk [vmem:[%s200 + $0x70] sm:$0xff] %vm627, %v625
        %643 = vst.msk [vmem:[%s200 + $0x78] sm:$0xff] %vm627, %v626
        %s644 = sand.u32 %s113, 1
        %s645 = sand.u32 %s113, 1
        %s646 = smul.addr %s645, 128
        %s647 = scalar_lea.vmem [#allocation3], %s646
        // Predicated region
        $region37: #{multi_scale_spatial_attention.2} parent=35 // pred_check
          %p648 = pneg %p123
        $region38: #{multi_scale_spatial_attention.2} parent=35 // pred_check_branch
          %650 = sbr.rel (%p648) target = $region40
        $region39: #{multi_scale_spatial_attention.2} parent=35 // pred_region
          %s651 = smul.u32 16, %s16
          %s652 = ssub.s32 20, %s651
          %p653 = scmp.lt.s32.totalorder %s652, 16
          %s654 = scalar_select %p653, %s652, 16
          %s655 = smul.u32 128, %s654
          %p656 = scmp.ne.s32.totalorder 0, %s655
          %s657 = smul.addr %s651, 8
          %s658 = scalar_lea.vmem %s4, %s657
          // Predicated region
          $region41: #{multi_scale_spatial_attention.2} parent=39 // pred_check
            %p659 = pneg %p656
          $region42: #{multi_scale_spatial_attention.2} parent=39 // pred_check_branch
            %661 = sbr.rel (%p659) target = $region44
          $region43: #{multi_scale_spatial_attention.2} parent=39 // pred_region
            // Predicated region
            $region45: #{multi_scale_spatial_attention.2} parent=43 // pred_check
              _
            $region46: #{multi_scale_spatial_attention.2} parent=43 // pred_check_branch
              %663 = sbr.rel (0) target = $region48
            $region47: #{multi_scale_spatial_attention.2} parent=43 // pred_region
              // Predicated region
              $region67: #{multi_scale_spatial_attention.2} parent=47 // pred_check
                _
              $region68: #{multi_scale_spatial_attention.2} parent=47 // pred_check_branch
                %742 = sbr.rel (0) target = $region70
              $region69: #{multi_scale_spatial_attention.2} parent=47 // pred_region
                %s743 = sshrl.u32 %s654, 4
                // While loop
                $region71: #{multi_scale_spatial_attention.2} parent=69 // loop_pre_header
                  _
                $region72: #{multi_scale_spatial_attention.2} parent=69 // loop_header
                  %s745 = sphi 0, %s747
                  %p746 = scmp.ge.s32.totalorder %s745, %s743
                  %s750 = sphi 0, %s787
                  %s751 = sphi %s647, %s790
                  %s752 = sphi %s658, %s791
                $region73: #{multi_scale_spatial_attention.2} parent=69 // loop_header_branch
                  %749 = sbr.rel (%p746) target = $region77
                $region74: #{multi_scale_spatial_attention.2} parent=69 // loop_body
                  %v753 = vld [vmem:[%s751] sm:$0xff]
                  %754 = vst [vmem:[%s752] sm:$0xff] %v753
                  %v755 = vld [vmem:[%s751 + $0x8] sm:$0xff]
                  %756 = vst [vmem:[%s752 + $0x8] sm:$0xff] %v755
                  %v757 = vld [vmem:[%s751 + $0x10] sm:$0xff]
                  %758 = vst [vmem:[%s752 + $0x10] sm:$0xff] %v757
                  %v759 = vld [vmem:[%s751 + $0x18] sm:$0xff]
                  %760 = vst [vmem:[%s752 + $0x18] sm:$0xff] %v759
                  %v761 = vld [vmem:[%s751 + $0x20] sm:$0xff]
                  %762 = vst [vmem:[%s752 + $0x20] sm:$0xff] %v761
                  %v763 = vld [vmem:[%s751 + $0x28] sm:$0xff]
                  %764 = vst [vmem:[%s752 + $0x28] sm:$0xff] %v763
                  %v765 = vld [vmem:[%s751 + $0x30] sm:$0xff]
                  %766 = vst [vmem:[%s752 + $0x30] sm:$0xff] %v765
                  %v767 = vld [vmem:[%s751 + $0x38] sm:$0xff]
                  %768 = vst [vmem:[%s752 + $0x38] sm:$0xff] %v767
                  %v769 = vld [vmem:[%s751 + $0x40] sm:$0xff]
                  %770 = vst [vmem:[%s752 + $0x40] sm:$0xff] %v769
                  %v771 = vld [vmem:[%s751 + $0x48] sm:$0xff]
                  %772 = vst [vmem:[%s752 + $0x48] sm:$0xff] %v771
                  %v773 = vld [vmem:[%s751 + $0x50] sm:$0xff]
                  %774 = vst [vmem:[%s752 + $0x50] sm:$0xff] %v773
                  %v775 = vld [vmem:[%s751 + $0x58] sm:$0xff]
                  %776 = vst [vmem:[%s752 + $0x58] sm:$0xff] %v775
                  %v777 = vld [vmem:[%s751 + $0x60] sm:$0xff]
                  %778 = vst [vmem:[%s752 + $0x60] sm:$0xff] %v777
                  %v779 = vld [vmem:[%s751 + $0x68] sm:$0xff]
                  %780 = vst [vmem:[%s752 + $0x68] sm:$0xff] %v779
                  %v781 = vld [vmem:[%s751 + $0x70] sm:$0xff]
                  %782 = vst [vmem:[%s752 + $0x70] sm:$0xff] %v781
                  %v783 = vld [vmem:[%s751 + $0x78] sm:$0xff]
                  %784 = vst [vmem:[%s752 + $0x78] sm:$0xff] %v783
                  %s785 = sadd.s32 1, %s750
                  %p786 = scmp.ge.s32.totalorder %s785, %s743
                  %s787 = scalar_select %p786, 0, %s785
                  %s788 = smul.u32 %s787, 128
                  %s789 = smul.u32 %s787, 128
                  %s790 = scalar_lea.vmem %s647, %s788 [#allocation3]
                  %s791 = scalar_lea.vmem %s658, %s789
                $region75: #{multi_scale_spatial_attention.2} parent=69 // loop_footer
                  %s747 = sadd.s32 %s745, 1
                $region76: #{multi_scale_spatial_attention.2} parent=69 // loop_footer_branch
                  %744 = sbr.rel target = $region72
                $region77: #{multi_scale_spatial_attention.2} parent=69 // loop_exit
                  _
                %s792 = sshrl.u32 %s654, 4
                %s793 = sand.u32 %s654, 15
                %s794 = smul.u32 %s792, 16
                %s795 = smul.u32 8, %s794
                %s796 = scalar_lea.vmem %s647, %s795 [#allocation3]
                %s797 = smul.u32 8, %s794
                %s798 = scalar_lea.vmem %s658, %s797
                // While loop
                $region78: #{multi_scale_spatial_attention.2} parent=69 // loop_pre_header
                  _
                $region79: #{multi_scale_spatial_attention.2} parent=69 // loop_header
                  %s800 = sphi 0, %s802
                  %p801 = scmp.ge.s32.totalorder %s800, %s793
                  %s805 = sphi 0, %s812
                  %s806 = sphi %s796, %s815
                  %s807 = sphi %s798, %s816
                $region80: #{multi_scale_spatial_attention.2} parent=69 // loop_header_branch
                  %804 = sbr.rel (%p801) target = $region84
                $region81: #{multi_scale_spatial_attention.2} parent=69 // loop_body
                  %v808 = vld [vmem:[%s806] sm:$0xff]
                  %809 = vst [vmem:[%s807] sm:$0xff] %v808
                  %s810 = sadd.s32 1, %s805
                  %p811 = scmp.ge.s32.totalorder %s810, %s793
                  %s812 = scalar_select %p811, 0, %s810
                  %s813 = smul.u32 %s812, 8
                  %s814 = smul.u32 %s812, 8
                  %s815 = scalar_lea.vmem %s796, %s813 [#allocation3]
                  %s816 = scalar_lea.vmem %s798, %s814
                $region82: #{multi_scale_spatial_attention.2} parent=69 // loop_footer
                  %s802 = sadd.s32 %s800, 1
                $region83: #{multi_scale_spatial_attention.2} parent=69 // loop_footer_branch
                  %799 = sbr.rel target = $region79
                $region84: #{multi_scale_spatial_attention.2} parent=69 // loop_exit
                  _
              $region70: #{multi_scale_spatial_attention.2} parent=47 // pred_fallthru
                _
              // Predicated region
              $region85: #{multi_scale_spatial_attention.2} parent=47 // pred_check
                _
              $region86: #{multi_scale_spatial_attention.2} parent=47 // pred_check_branch
                %818 = sbr.rel target = $region88
              $region87: #{multi_scale_spatial_attention.2} parent=47 // pred_region
                _
              $region88: #{multi_scale_spatial_attention.2} parent=47 // pred_fallthru
                _
            $region48: #{multi_scale_spatial_attention.2} parent=43 // pred_fallthru
              _
            // Predicated region
            $region49: #{multi_scale_spatial_attention.2} parent=43 // pred_check
              _
            $region50: #{multi_scale_spatial_attention.2} parent=43 // pred_check_branch
              %665 = sbr.rel target = $region52
            $region51: #{multi_scale_spatial_attention.2} parent=43 // pred_region
              %s667 = sshrl.u32 %s654, 4
              // While loop
              $region53: #{multi_scale_spatial_attention.2} parent=51 // loop_pre_header
                _
              $region54: #{multi_scale_spatial_attention.2} parent=51 // loop_header
                %s669 = sphi 0, %s671
                %p670 = scmp.ge.s32.totalorder %s669, %s667
                %s674 = sphi 0, %s711
                %s675 = sphi %s647, %s714
                %s676 = sphi %s658, %s715
              $region55: #{multi_scale_spatial_attention.2} parent=51 // loop_header_branch
                %673 = sbr.rel (%p670) target = $region59
              $region56: #{multi_scale_spatial_attention.2} parent=51 // loop_body
                %v677 = vld [vmem:[%s675] sm:$0xff]
                %678 = vst [vmem:[%s676] sm:$0xff] %v677
                %v679 = vld [vmem:[%s675 + $0x8] sm:$0xff]
                %680 = vst [vmem:[%s676 + $0x8] sm:$0xff] %v679
                %v681 = vld [vmem:[%s675 + $0x10] sm:$0xff]
                %682 = vst [vmem:[%s676 + $0x10] sm:$0xff] %v681
                %v683 = vld [vmem:[%s675 + $0x18] sm:$0xff]
                %684 = vst [vmem:[%s676 + $0x18] sm:$0xff] %v683
                %v685 = vld [vmem:[%s675 + $0x20] sm:$0xff]
                %686 = vst [vmem:[%s676 + $0x20] sm:$0xff] %v685
                %v687 = vld [vmem:[%s675 + $0x28] sm:$0xff]
                %688 = vst [vmem:[%s676 + $0x28] sm:$0xff] %v687
                %v689 = vld [vmem:[%s675 + $0x30] sm:$0xff]
                %690 = vst [vmem:[%s676 + $0x30] sm:$0xff] %v689
                %v691 = vld [vmem:[%s675 + $0x38] sm:$0xff]
                %692 = vst [vmem:[%s676 + $0x38] sm:$0xff] %v691
                %v693 = vld [vmem:[%s675 + $0x40] sm:$0xff]
                %694 = vst [vmem:[%s676 + $0x40] sm:$0xff] %v693
                %v695 = vld [vmem:[%s675 + $0x48] sm:$0xff]
                %696 = vst [vmem:[%s676 + $0x48] sm:$0xff] %v695
                %v697 = vld [vmem:[%s675 + $0x50] sm:$0xff]
                %698 = vst [vmem:[%s676 + $0x50] sm:$0xff] %v697
                %v699 = vld [vmem:[%s675 + $0x58] sm:$0xff]
                %700 = vst [vmem:[%s676 + $0x58] sm:$0xff] %v699
                %v701 = vld [vmem:[%s675 + $0x60] sm:$0xff]
                %702 = vst [vmem:[%s676 + $0x60] sm:$0xff] %v701
                %v703 = vld [vmem:[%s675 + $0x68] sm:$0xff]
                %704 = vst [vmem:[%s676 + $0x68] sm:$0xff] %v703
                %v705 = vld [vmem:[%s675 + $0x70] sm:$0xff]
                %706 = vst [vmem:[%s676 + $0x70] sm:$0xff] %v705
                %v707 = vld [vmem:[%s675 + $0x78] sm:$0xff]
                %708 = vst [vmem:[%s676 + $0x78] sm:$0xff] %v707
                %s709 = sadd.s32 1, %s674
                %p710 = scmp.ge.s32.totalorder %s709, %s667
                %s711 = scalar_select %p710, 0, %s709
                %s712 = smul.u32 %s711, 128
                %s713 = smul.u32 %s711, 128
                %s714 = scalar_lea.vmem %s647, %s712 [#allocation3]
                %s715 = scalar_lea.vmem %s658, %s713
              $region57: #{multi_scale_spatial_attention.2} parent=51 // loop_footer
                %s671 = sadd.s32 %s669, 1
              $region58: #{multi_scale_spatial_attention.2} parent=51 // loop_footer_branch
                %668 = sbr.rel target = $region54
              $region59: #{multi_scale_spatial_attention.2} parent=51 // loop_exit
                _
              %s716 = sshrl.u32 %s654, 4
              %s717 = sand.u32 %s654, 15
              %s718 = smul.u32 %s716, 16
              %s719 = smul.u32 8, %s718
              %s720 = scalar_lea.vmem %s647, %s719 [#allocation3]
              %s721 = smul.u32 8, %s718
              %s722 = scalar_lea.vmem %s658, %s721
              // While loop
              $region60: #{multi_scale_spatial_attention.2} parent=51 // loop_pre_header
                _
              $region61: #{multi_scale_spatial_attention.2} parent=51 // loop_header
                %s724 = sphi 0, %s726
                %p725 = scmp.ge.s32.totalorder %s724, %s717
                %s729 = sphi 0, %s736
                %s730 = sphi %s720, %s739
                %s731 = sphi %s722, %s740
              $region62: #{multi_scale_spatial_attention.2} parent=51 // loop_header_branch
                %728 = sbr.rel (%p725) target = $region66
              $region63: #{multi_scale_spatial_attention.2} parent=51 // loop_body
                %v732 = vld [vmem:[%s730] sm:$0xff]
                %733 = vst [vmem:[%s731] sm:$0xff] %v732
                %s734 = sadd.s32 1, %s729
                %p735 = scmp.ge.s32.totalorder %s734, %s717
                %s736 = scalar_select %p735, 0, %s734
                %s737 = smul.u32 %s736, 8
                %s738 = smul.u32 %s736, 8
                %s739 = scalar_lea.vmem %s720, %s737 [#allocation3]
                %s740 = scalar_lea.vmem %s722, %s738
              $region64: #{multi_scale_spatial_attention.2} parent=51 // loop_footer
                %s726 = sadd.s32 %s724, 1
              $region65: #{multi_scale_spatial_attention.2} parent=51 // loop_footer_branch
                %723 = sbr.rel target = $region61
              $region66: #{multi_scale_spatial_attention.2} parent=51 // loop_exit
                _
            $region52: #{multi_scale_spatial_attention.2} parent=43 // pred_fallthru
              _
          $region44: #{multi_scale_spatial_attention.2} parent=39 // pred_fallthru
            _
          %819 = vnop
        $region40: #{multi_scale_spatial_attention.2} parent=35 // pred_fallthru
          _
      $region36: #{multi_scale_spatial_attention.2} parent=5 // pred_fallthru
        _
      %p820 = scmp.le.s32.totalorder 2, %s11
      // Predicated region
      $region89: #{multi_scale_spatial_attention.2} parent=5 // pred_check
        %p821 = pneg %p820
      $region90: #{multi_scale_spatial_attention.2} parent=5 // pred_check_branch
        %823 = sbr.rel (%p821) target = $region92
      $region91: #{multi_scale_spatial_attention.2} parent=5 // pred_region
        %s824 = ssub.s32 %s11, 2
        // Predicated region
        $region93: #{multi_scale_spatial_attention.2} parent=91 // pred_check
          %p825 = pneg %p129
        $region94: #{multi_scale_spatial_attention.2} parent=91 // pred_check_branch
          %827 = sbr.rel (%p825) target = $region96
        $region95: #{multi_scale_spatial_attention.2} parent=91 // pred_region
          %s828 = sand.u32 %s114, 1
          %s829 = sand.u32 %s114, 1
          %s830 = smul.addr %s829, 128
          %s831 = scalar_lea.vmem [#allocation3], %s830
        $region96: #{multi_scale_spatial_attention.2} parent=91 // pred_fallthru
          _
      $region92: #{multi_scale_spatial_attention.2} parent=5 // pred_fallthru
        _
    $region6: #{multi_scale_spatial_attention.2} parent=1 // loop_footer
      %s15 = sadd.s32 1, %s11
    $region7: #{multi_scale_spatial_attention.2} parent=1 // loop_footer_branch
      %10 = sbr.rel target = $region3
    $region8: #{multi_scale_spatial_attention.2} parent=1 // loop_exit
      _

// kernel: multi_scale_spatial_attention.3
$region0: #{multi_scale_spatial_attention.3}
  #allocation0 [shape = 'u32[]', space=smem, size = 0x4, offset = 0x4, fixed_abs, tag = 'smem constant byte address 0x4 - core index']
  #allocation1 [shape = 'u32[144,128]{1,0:T(1,128)}', space=vmem, size = 0x12000, scoped, tag = 'internal scratch']
  #allocation2 [shape = 'f32[1]{0:T(128)S(6)}', space=smem, size = 0x200, scoped, tag = 'scoped memory for multi_scale_spatial_attention.3']
  %s0 = inlined_call_operand.vmem [shape: bf16[512,16], index: 0, kind: input, shape index: {}]
  %s1 = inlined_call_operand.vmem [shape: bf16[512,2], index: 1, kind: input, shape index: {}]
  %s2 = inlined_call_operand.vmem [shape: bf16[16,2], index: 2, kind: input, shape index: {}]
  %s3 = inlined_call_operand.vmem [shape: f32[2,2], index: 3, kind: input, shape index: {}]
  %s4 = inlined_call_operand.<no memory space> [shape: f32[1], index: 4, kind: input, shape index: {}]
  %s5 = inlined_call_operand.vmem [shape: bf16[3,16,16], index: 5, kind: input, shape index: {}]
  %s6 = inlined_call_operand.vmem [shape: f32[1,16], index: 6, kind: input, shape index: {}]
  %s7 = inlined_call_operand.vmem [shape: bf16[512,16], index: 7, kind: output, shape index: {}]
  %s8 = sld [smem:[#allocation0]]
  $region61: #{multi_scale_spatial_attention.3} parent=0
    _
  %s10 = ssub.s32 1, %s8
  %s11 = scalar_select 0, %s10, %s8
  %12 = sst [smem:[#allocation2]] %s4
  loop: start=0, step=1, limit=6
  $region2: #{multi_scale_spatial_attention.3} parent=0 // loop_pre_header
    _
  $region3: #{multi_scale_spatial_attention.3} parent=0 // loop_header
    %s14 = sphi 0, %s18
    %p15 = scmp.ge.s32.totalorder %s14, 6
    %s24 = sphi 0, %s26
    %s27 = sphi 0, %s24
    %s28 = sphi 0, %s27
    %s44 = sphi 0, %s28
    %s50 = sphi 0, %s52
    %s53 = sphi 0, %s50
    %s54 = sphi 0, %s53
    %s70 = sphi 0, %s54
    %s74 = sphi 0, %s74
    %s76 = sphi 0, %s74
    %s77 = sphi 0, %s76
    %s91 = sphi 0, %s77
    %s95 = sphi 0, %s95
    %s97 = sphi 0, %s95
    %s98 = sphi 0, %s97
    %s112 = sphi 0, %s98
    %s116 = sphi 0, %s116
    %s118 = sphi 0, %s116
    %s119 = sphi 0, %s118
    %s133 = sphi 0, %s119
    %s137 = sphi 0, %s137
    %s139 = sphi 0, %s137
    %s140 = sphi 0, %s139
    %s154 = sphi 0, %s140
    %s158 = sphi 0, %s158
    %s160 = sphi 0, %s158
    %s161 = sphi 0, %s160
    %s175 = sphi 0, %s161
    %s181 = sphi 0, %s183
    %s184 = sphi 0, %s181
    %s185 = sphi 0, %s184
    %s201 = sphi 0, %s185
  $region4: #{multi_scale_spatial_attention.3} parent=0 // loop_header_branch
    %17 = sbr.rel (%p15) target = $region8
  $region5: #{multi_scale_spatial_attention.3} parent=0 // loop_body
    %s19 = ssub.s32 %s14, 1
    %s20 = ssub.s32 %s14, 2
    %s21 = sadd.s32 %s14, 1
    %s22 = ssub.s32 %s14, %s21
    %p23 = scmp.eq.s32.totalorder %s22, 0
    %s25 = sadd.s32 %s24, 1
    %s26 = scalar_select %p23, %s24, %s25
    %p29 = pneg %p23
    %p30 = scmp.eq.s32.totalorder %s14, 3
    %p31 = por %p29, %p30
    %p32 = scmp.ne.s32.totalorder %s24, %s27
    %p33 = scmp.eq.s32.totalorder %s14, 0
    %p34 = por %p32, %p33
    %p35 = scmp.ne.s32.totalorder %s24, %s27
    %p36 = scmp.eq.s32.totalorder %s19, 3
    %p37 = por %p35, %p36
    %p38 = scmp.ne.s32.totalorder %s27, %s28
    %p39 = scmp.eq.s32.totalorder %s19, 0
    %p40 = por %p38, %p39
    %p41 = scmp.ne.s32.totalorder %s27, %s28
    %p42 = scmp.eq.s32.totalorder %s20, 3
    %p43 = por %p41, %p42
    %p45 = scmp.ne.s32.totalorder %s28, %s44
    %p46 = scmp.eq.s32.totalorder %s20, 0
    %p47 = por %p45, %p46
    %s48 = ssub.s32 %s14, %s21
    %p49 = scmp.eq.s32.totalorder %s48, 0
    %s51 = sadd.s32 %s50, 1
    %s52 = scalar_select %p49, %s50, %s51
    %p55 = pneg %p49
    %p56 = scmp.eq.s32.totalorder %s14, 3
    %p57 = por %p55, %p56
    %p58 = scmp.ne.s32.totalorder %s50, %s53
    %p59 = scmp.eq.s32.totalorder %s14, 0
    %p60 = por %p58, %p59
    %p61 = scmp.ne.s32.totalorder %s50, %s53
    %p62 = scmp.eq.s32.totalorder %s19, 3
    %p63 = por %p61, %p62
    %p64 = scmp.ne.s32.totalorder %s53, %s54
    %p65 = scmp.eq.s32.totalorder %s19, 0
    %p66 = por %p64, %p65
    %p67 = scmp.ne.s32.totalorder %s53, %s54
    %p68 = scmp.eq.s32.totalorder %s20, 3
    %p69 = por %p67, %p68
    %p71 = scmp.ne.s32.totalorder %s54, %s70
    %p72 = scmp.eq.s32.totalorder %s20, 0
    %p73 = por %p71, %p72
    %s75 = sadd.s32 %s74, 1
    %p78 = scmp.eq.s32.totalorder %s14, 3
    %p79 = scmp.ne.s32.totalorder %s74, %s76
    %p80 = scmp.eq.s32.totalorder %s14, 0
    %p81 = por %p79, %p80
    %p82 = scmp.ne.s32.totalorder %s74, %s76
    %p83 = scmp.eq.s32.totalorder %s19, 3
    %p84 = por %p82, %p83
    %p85 = scmp.ne.s32.totalorder %s76, %s77
    %p86 = scmp.eq.s32.totalorder %s19, 0
    %p87 = por %p85, %p86
    %p88 = scmp.ne.s32.totalorder %s76, %s77
    %p89 = scmp.eq.s32.totalorder %s20, 3
    %p90 = por %p88, %p89
    %p92 = scmp.ne.s32.totalorder %s77, %s91
    %p93 = scmp.eq.s32.totalorder %s20, 0
    %p94 = por %p92, %p93
    %s96 = sadd.s32 %s95, 1
    %p99 = scmp.eq.s32.totalorder %s14, 3
    %p100 = scmp.ne.s32.totalorder %s95, %s97
    %p101 = scmp.eq.s32.totalorder %s14, 0
    %p102 = por %p100, %p101
    %p103 = scmp.ne.s32.totalorder %s95, %s97
    %p104 = scmp.eq.s32.totalorder %s19, 3
    %p105 = por %p103, %p104
    %p106 = scmp.ne.s32.totalorder %s97, %s98
    %p107 = scmp.eq.s32.totalorder %s19, 0
    %p108 = por %p106, %p107
    %p109 = scmp.ne.s32.totalorder %s97, %s98
    %p110 = scmp.eq.s32.totalorder %s20, 3
    %p111 = por %p109, %p110
    %p113 = scmp.ne.s32.totalorder %s98, %s112
    %p114 = scmp.eq.s32.totalorder %s20, 0
    %p115 = por %p113, %p114
    %s117 = sadd.s32 %s116, 1
    %p120 = scmp.eq.s32.totalorder %s14, 3
    %p121 = scmp.ne.s32.totalorder %s116, %s118
    %p122 = scmp.eq.s32.totalorder %s14, 0
    %p123 = por %p121, %p122
    %p124 = scmp.ne.s32.totalorder %s116, %s118
    %p125 = scmp.eq.s32.totalorder %s19, 3
    %p126 = por %p124, %p125
    %p127 = scmp.ne.s32.totalorder %s118, %s119
    %p128 = scmp.eq.s32.totalorder %s19, 0
    %p129 = por %p127, %p128
    %p130 = scmp.ne.s32.totalorder %s118, %s119
    %p131 = scmp.eq.s32.totalorder %s20, 3
    %p132 = por %p130, %p131
    %p134 = scmp.ne.s32.totalorder %s119, %s133
    %p135 = scmp.eq.s32.totalorder %s20, 0
    %p136 = por %p134, %p135
    %s138 = sadd.s32 %s137, 1
    %p141 = scmp.eq.s32.totalorder %s14, 3
    %p142 = scmp.ne.s32.totalorder %s137, %s139
    %p143 = scmp.eq.s32.totalorder %s14, 0
    %p144 = por %p142, %p143
    %p145 = scmp.ne.s32.totalorder %s137, %s139
    %p146 = scmp.eq.s32.totalorder %s19, 3
    %p147 = por %p145, %p146
    %p148 = scmp.ne.s32.totalorder %s139, %s140
    %p149 = scmp.eq.s32.totalorder %s19, 0
    %p150 = por %p148, %p149
    %p151 = scmp.ne.s32.totalorder %s139, %s140
    %p152 = scmp.eq.s32.totalorder %s20, 3
    %p153 = por %p151, %p152
    %p155 = scmp.ne.s32.totalorder %s140, %s154
    %p156 = scmp.eq.s32.totalorder %s20, 0
    %p157 = por %p155, %p156
    %s159 = sadd.s32 %s158, 1
    %p162 = scmp.eq.s32.totalorder %s14, 3
    %p163 = scmp.ne.s32.totalorder %s158, %s160
    %p164 = scmp.eq.s32.totalorder %s14, 0
    %p165 = por %p163, %p164
    %p166 = scmp.ne.s32.totalorder %s158, %s160
    %p167 = scmp.eq.s32.totalorder %s19, 3
    %p168 = por %p166, %p167
    %p169 = scmp.ne.s32.totalorder %s160, %s161
    %p170 = scmp.eq.s32.totalorder %s19, 0
    %p171 = por %p169, %p170
    %p172 = scmp.ne.s32.totalorder %s160, %s161
    %p173 = scmp.eq.s32.totalorder %s20, 3
    %p174 = por %p172, %p173
    %p176 = scmp.ne.s32.totalorder %s161, %s175
    %p177 = scmp.eq.s32.totalorder %s20, 0
    %p178 = por %p176, %p177
    %s179 = ssub.s32 %s14, %s21
    %p180 = scmp.eq.s32.totalorder %s179, 0
    %s182 = sadd.s32 %s181, 1
    %s183 = scalar_select %p180, %s181, %s182
    %p186 = pneg %p180
    %p187 = scmp.eq.s32.totalorder %s14, 3
    %p188 = por %p186, %p187
    %p189 = scmp.ne.s32.totalorder %s181, %s184
    %p190 = scmp.eq.s32.totalorder %s14, 0
    %p191 = por %p189, %p190
    %p192 = scmp.ne.s32.totalorder %s181, %s184
    %p193 = scmp.eq.s32.totalorder %s19, 3
    %p194 = por %p192, %p193
    %p195 = scmp.ne.s32.totalorder %s184, %s185
    %p196 = scmp.eq.s32.totalorder %s19, 0
    %p197 = por %p195, %p196
    %p198 = scmp.ne.s32.totalorder %s184, %s185
    %p199 = scmp.eq.s32.totalorder %s20, 3
    %p200 = por %p198, %p199
    %p202 = scmp.ne.s32.totalorder %s185, %s201
    %p203 = scmp.eq.s32.totalorder %s20, 0
    %p204 = por %p202, %p203
    %p205 = scmp.le.s32.totalorder 1, %s14
    %p206 = scmp.lt.s32.totalorder %s14, 5
    %p207 = pnand %p205, %p206
    %p208 = pneg %p207
    // Predicated region
    $region9: #{multi_scale_spatial_attention.3} parent=5 // pred_check
      _
    $region10: #{multi_scale_spatial_attention.3} parent=5 // pred_check_branch
      %210 = sbr.rel (%p207) target = $region12
    $region11: #{multi_scale_spatial_attention.3} parent=5 // pred_region
      %s211 = ssub.s32 %s14, 1
      // Predicated region
      $region13: #{multi_scale_spatial_attention.3} parent=11 // pred_check
        %p212 = pneg %p87
      $region14: #{multi_scale_spatial_attention.3} parent=11 // pred_check_branch
        %214 = sbr.rel (%p212) target = $region16
      $region15: #{multi_scale_spatial_attention.3} parent=11 // pred_region
        _
      $region16: #{multi_scale_spatial_attention.3} parent=11 // pred_fallthru
        _
      // Predicated region
      $region17: #{multi_scale_spatial_attention.3} parent=11 // pred_check
        %p215 = pneg %p108
      $region18: #{multi_scale_spatial_attention.3} parent=11 // pred_check_branch
        %217 = sbr.rel (%p215) target = $region20
      $region19: #{multi_scale_spatial_attention.3} parent=11 // pred_region
        _
      $region20: #{multi_scale_spatial_attention.3} parent=11 // pred_fallthru
        _
      // Predicated region
      $region21: #{multi_scale_spatial_attention.3} parent=11 // pred_check
        %p218 = pneg %p129
      $region22: #{multi_scale_spatial_attention.3} parent=11 // pred_check_branch
        %220 = sbr.rel (%p218) target = $region24
      $region23: #{multi_scale_spatial_attention.3} parent=11 // pred_region
        _
      $region24: #{multi_scale_spatial_attention.3} parent=11 // pred_fallthru
        _
      // Predicated region
      $region25: #{multi_scale_spatial_attention.3} parent=11 // pred_check
        %p221 = pneg %p150
      $region26: #{multi_scale_spatial_attention.3} parent=11 // pred_check_branch
        %223 = sbr.rel (%p221) target = $region28
      $region27: #{multi_scale_spatial_attention.3} parent=11 // pred_region
        _
      $region28: #{multi_scale_spatial_attention.3} parent=11 // pred_fallthru
        _
      // Predicated region
      $region29: #{multi_scale_spatial_attention.3} parent=11 // pred_check
        %p224 = pneg %p171
      $region30: #{multi_scale_spatial_attention.3} parent=11 // pred_check_branch
        %226 = sbr.rel (%p224) target = $region32
      $region31: #{multi_scale_spatial_attention.3} parent=11 // pred_region
        _
      $region32: #{multi_scale_spatial_attention.3} parent=11 // pred_fallthru
        _
    $region12: #{multi_scale_spatial_attention.3} parent=5 // pred_fallthru
      _
    %p227 = scmp.lt.s32.totalorder %s14, 4
    // Predicated region
    $region33: #{multi_scale_spatial_attention.3} parent=5 // pred_check
      %p228 = pneg %p227
    $region34: #{multi_scale_spatial_attention.3} parent=5 // pred_check_branch
      %230 = sbr.rel (%p228) target = $region36
    $region35: #{multi_scale_spatial_attention.3} parent=5 // pred_region
      // Predicated region
      $region37: #{multi_scale_spatial_attention.3} parent=35 // pred_check
        %p231 = pneg %p34
      $region38: #{multi_scale_spatial_attention.3} parent=35 // pred_check_branch
        %233 = sbr.rel (%p231) target = $region40
      $region39: #{multi_scale_spatial_attention.3} parent=35 // pred_region
        %s234 = smul.u32 16, %s14
        %p235 = scmp.lt.s32.totalorder %s234, 63
        %s236 = scalar_select %p235, %s234, 63
        %s237 = smul.addr %s236, 4
        %s238 = scalar_lea.vmem %s0, %s237
        %s239 = smul.u32 16, %s14
      $region40: #{multi_scale_spatial_attention.3} parent=35 // pred_fallthru
        _
      // Predicated region
      $region41: #{multi_scale_spatial_attention.3} parent=35 // pred_check
        %p240 = pneg %p60
      $region42: #{multi_scale_spatial_attention.3} parent=35 // pred_check_branch
        %242 = sbr.rel (%p240) target = $region44
      $region43: #{multi_scale_spatial_attention.3} parent=35 // pred_region
        %s243 = smul.u32 16, %s14
        %p244 = scmp.lt.s32.totalorder %s243, 63
        %s245 = scalar_select %p244, %s243, 63
        %s246 = smul.addr %s245, 4
        %s247 = scalar_lea.vmem %s1, %s246
        %s248 = smul.u32 16, %s14
      $region44: #{multi_scale_spatial_attention.3} parent=35 // pred_fallthru
        _
    $region36: #{multi_scale_spatial_attention.3} parent=5 // pred_fallthru
      _
    %p249 = scmp.le.s32.totalorder 1, %s14
    %p250 = scmp.lt.s32.totalorder %s14, 5
    %p251 = pnand %p249, %p250
    %p252 = pneg %p251
    // Predicated region
    $region45: #{multi_scale_spatial_attention.3} parent=5 // pred_check
      _
    $region46: #{multi_scale_spatial_attention.3} parent=5 // pred_check_branch
      %254 = sbr.rel (%p251) target = $region48
    $region47: #{multi_scale_spatial_attention.3} parent=5 // pred_region
      %s255 = ssub.s32 %s14, 1
      %s256 = smul.u32 16, %s19
      %p257 = scmp.lt.s32.totalorder %s256, 63
      %s258 = scalar_select %p257, %s256, 63
      %s259 = smul.addr %s258, 4
      %s260 = scalar_lea.vmem %s0, %s259
      %p261 = pneg %p40
      %p262 = pneg %p37
      %s263 = smul.u32 16, %s19
      %p264 = scmp.lt.s32.totalorder %s263, 63
      %s265 = scalar_select %p264, %s263, 63
      %s266 = smul.addr %s265, 4
      %s267 = scalar_lea.vmem %s1, %s266
      %p268 = pneg %p66
      %p269 = pneg %p63
      %p270 = pneg %p87
      %p271 = pneg %p84
      %p272 = pneg %p108
      %p273 = pneg %p105
      %p274 = pneg %p129
      %p275 = pneg %p126
      %p276 = pneg %p150
      %p277 = pneg %p147
      %p278 = pneg %p171
      %p279 = pneg %p168
      %p280 = pneg %p197
      %p281 = pneg %p194
      %s282 = smul.u32 16, %s19
      %p283 = scmp.lt.s32.totalorder %s282, 63
      %s284 = scalar_select %p283, %s282, 63
      %s285 = smul.addr %s284, 4
      %s286 = scalar_lea.vmem %s7, %s285
      %s287 = smul.u32 16, %s19
      %p288 = scmp.lt.s32.totalorder %s287, 63
      %s289 = scalar_select %p288, %s287, 63
      %s290 = smul.addr %s289, 4
      %s291 = scalar_lea.vmem %s0, %s290
      %s292 = smul.u32 16, %s19
      %s293 = smul.u32 16, %s19
      %p294 = scmp.lt.s32.totalorder %s293, 63
      %s295 = scalar_select %p294, %s293, 63
      %s296 = smul.addr %s295, 4
      %s297 = scalar_lea.vmem %s1, %s296
      %s298 = smul.u32 16, %s19
      %s299 = smul.u32 16, %s19
      %p300 = scmp.lt.s32.totalorder %s299, 63
      %s301 = scalar_select %p300, %s299, 63
      %s302 = smul.addr %s301, 4
      %s303 = scalar_lea.vmem %s7, %s302
      %s304 = smul.u32 16, %s19
      %v306 = vld [vmem:[%s291] sm:$0xf]
      %v307 = vld [vmem:[%s291 + $0x4] sm:$0xf]
      %v308 = vld [vmem:[%s291 + $0x8] sm:$0xf]
      %v309 = vld [vmem:[%s291 + $0xc] sm:$0xf]
      %v310 = vld [vmem:[%s291 + $0x10] sm:$0xf]
      %v311 = vld [vmem:[%s291 + $0x14] sm:$0xf]
      %v312 = vld [vmem:[%s291 + $0x18] sm:$0xf]
      %v313 = vld [vmem:[%s291 + $0x1c] sm:$0xf]
      %v314 = vld [vmem:[%s291 + $0x20] sm:$0xf]
      %v315 = vld [vmem:[%s291 + $0x24] sm:$0xf]
      %v316 = vld [vmem:[%s291 + $0x28] sm:$0xf]
      %v317 = vld [vmem:[%s291 + $0x2c] sm:$0xf]
      %v318 = vld [vmem:[%s291 + $0x30] sm:$0xf]
      %v319 = vld [vmem:[%s291 + $0x34] sm:$0xf]
      %v320 = vld [vmem:[%s291 + $0x38] sm:$0xf]
      %v321 = vld [vmem:[%s291 + $0x3c] sm:$0xf]
      %v322 = vld [vmem:[%s3] sm:$0x3]
      %v323 = vld [vmem:[%s2] sm:$0xf]
      %v324 = vld [vmem:[%s2 + $0x4] sm:$0xf]
      %v325 = vlaneseq
      %v326 = vshrl.u32 %v325, 7
      %v327 = vsub.s32 0, %v326
      %v328 = vrot.slane %v322, %v327
      %v345 = vunpack.c.l.b16 %v306
      %v346 = vunpack.c.l.b16 %v307
      %v347 = vunpack.c.l.b16 %v308
      %v348 = vunpack.c.l.b16 %v309
      %v349 = vunpack.c.l.b16 %v310
      %v350 = vunpack.c.l.b16 %v311
      %v351 = vunpack.c.l.b16 %v312
      %v352 = vunpack.c.l.b16 %v313
      %v353 = vunpack.c.l.b16 %v314
      %v354 = vunpack.c.l.b16 %v315
      %v355 = vunpack.c.l.b16 %v316
      %v356 = vunpack.c.l.b16 %v317
      %v357 = vunpack.c.l.b16 %v318
      %v358 = vunpack.c.l.b16 %v319
      %v359 = vunpack.c.l.b16 %v320
      %v360 = vunpack.c.l.b16 %v321
      %v361 = vpack.c.b16 %v346, %v345
      %v362 = vpack.c.b16 %v348, %v347
      %v363 = vpack.c.b16 %v350, %v349
      %v364 = vpack.c.b16 %v352, %v351
      %v365 = vpack.c.b16 %v354, %v353
      %v366 = vpack.c.b16 %v356, %v355
      %v367 = vpack.c.b16 %v358, %v357
      %v368 = vpack.c.b16 %v360, %v359
      %v371 = vunpack.c.l.b16 %v323
      %v372 = vunpack.c.l.b16 %v324
      %v373 = vpack.c.b16 %v372, %v371
      %vm375 = vcmask 130048
      %v377 = vsel %vm375, %v361, 0
      %v380 = vsel %vm375, %v362, 0
      %v383 = vsel %vm375, %v363, 0
      %v386 = vsel %vm375, %v364, 0
      %v389 = vsel %vm375, %v365, 0
      %v392 = vsel %vm375, %v366, 0
      %v395 = vsel %vm375, %v367, 0
      %v398 = vsel %vm375, %v368, 0
      %400 = vmatprep.subr.bf16.mxu0 0
      %401 = vmatpush1.bf16.msra.mxu0 %v373
      %402 = vmatprep.subr.bf16.mxu0 0
      %403 = vmatpush1.bf16.msra.mxu0 0
      %404 = vmatprep.subr.bf16.mxu0 0
      %405 = vmatpush1.bf16.msra.mxu0 0
      %406 = vmatprep.subr.bf16.mxu0 0
      %407 = vmatpush1.bf16.msra.mxu0 0
      %408 = vmatprep.subr.bf16.mxu0 0
      %409 = vmatpush1.bf16.msra.mxu0 0
      %410 = vmatprep.subr.bf16.mxu0 0
      %411 = vmatpush1.bf16.msra.mxu0 0
      %412 = vmatprep.subr.bf16.mxu0 0
      %413 = vmatpush1.bf16.msra.mxu0 0
      %414 = vmatprep.subr.bf16.mxu0 0
      %415 = vmatpush1.bf16.msra.mxu0 0
      %416 = vmatprep.subr.bf16.mxu0 0
      %417 = vmatpush1.bf16.msra.mxu0 0
      %418 = vmatprep.subr.bf16.mxu0 0
      %419 = vmatpush1.bf16.msra.mxu0 0
      %420 = vmatprep.subr.bf16.mxu0 0
      %421 = vmatpush1.bf16.msra.mxu0 0
      %422 = vmatprep.subr.bf16.mxu0 0
      %423 = vmatpush1.bf16.msra.mxu0 0
      %424 = vmatprep.subr.bf16.mxu0 0
      %425 = vmatpush1.bf16.msra.mxu0 0
      %426 = vmatprep.subr.bf16.mxu0 0
      %427 = vmatpush1.bf16.msra.mxu0 0
      %428 = vmatprep.subr.bf16.mxu0 0
      %429 = vmatpush1.bf16.msra.mxu0 0
      %430 = vmatprep.subr.bf16.mxu0 0
      %431 = vmatpush1.bf16.msra.mxu0 0
      %432 = vmatprep.mubr.bf16.mxu0 0
      %433 = vmatmul.mubr.bf16.gmra.mrb[0].mxu0 %v377
      %v434 = vpop.f32.mrb[0].mxu0
      %v435 = vadd.f32 %v328, %v434
      %v436 = vpop.f32.mrb[0].mxu0
      %v437 = vpop.f32.mrb[0].mxu0
      %v438 = vadd.f32 %v328, %v437
      %v439 = vpop.f32.mrb[0].mxu0
      %440 = vmatprep.mubr.bf16.mxu0 0
      %441 = vmatmul.mubr.bf16.gmra.mrb[0].mxu0 %v380
      %v442 = vpop.f32.mrb[0].mxu0
      %v443 = vadd.f32 %v328, %v442
      %v444 = vpop.f32.mrb[0].mxu0
      %v445 = vpop.f32.mrb[0].mxu0
      %v446 = vadd.f32 %v328, %v445
      %v447 = vpop.f32.mrb[0].mxu0
      %448 = vmatprep.mubr.bf16.mxu0 0
      %449 = vmatmul.mubr.bf16.gmra.mrb[0].mxu0 %v383
      %v450 = vpop.f32.mrb[0].mxu0
      %v451 = vadd.f32 %v328, %v450
      %v452 = vpop.f32.mrb[0].mxu0
      %v453 = vpop.f32.mrb[0].mxu0
      %v454 = vadd.f32 %v328, %v453
      %v455 = vpop.f32.mrb[0].mxu0
      %456 = vmatprep.mubr.bf16.mxu0 0
      %457 = vmatmul.mubr.bf16.gmra.mrb[0].mxu0 %v386
      %v458 = vpop.f32.mrb[0].mxu0
      %v459 = vadd.f32 %v328, %v458
      %v460 = vpop.f32.mrb[0].mxu0
      %v461 = vpop.f32.mrb[0].mxu0
      %v462 = vadd.f32 %v328, %v461
      %v463 = vpop.f32.mrb[0].mxu0
      %464 = vmatprep.mubr.bf16.mxu0 0
      %465 = vmatmul.mubr.bf16.gmra.mrb[0].mxu0 %v389
      %v466 = vpop.f32.mrb[0].mxu0
      %v467 = vadd.f32 %v328, %v466
      %v468 = vpop.f32.mrb[0].mxu0
      %v469 = vpop.f32.mrb[0].mxu0
      %v470 = vadd.f32 %v328, %v469
      %v471 = vpop.f32.mrb[0].mxu0
      %472 = vmatprep.mubr.bf16.mxu0 0
      %473 = vmatmul.mubr.bf16.gmra.mrb[0].mxu0 %v392
      %v474 = vpop.f32.mrb[0].mxu0
      %v475 = vadd.f32 %v328, %v474
      %v476 = vpop.f32.mrb[0].mxu0
      %v477 = vpop.f32.mrb[0].mxu0
      %v478 = vadd.f32 %v328, %v477
      %v479 = vpop.f32.mrb[0].mxu0
      %480 = vmatprep.mubr.bf16.mxu0 0
      %481 = vmatmul.mubr.bf16.gmra.mrb[0].mxu0 %v395
      %v482 = vpop.f32.mrb[0].mxu0
      %v483 = vadd.f32 %v328, %v482
      %v484 = vpop.f32.mrb[0].mxu0
      %v485 = vpop.f32.mrb[0].mxu0
      %v486 = vadd.f32 %v328, %v485
      %v487 = vpop.f32.mrb[0].mxu0
      %488 = vmatprep.mubr.bf16.mxu0 0
      %489 = vmatmul.mubr.bf16.gmra.mrb[0].mxu0 %v398
      %v490 = vpop.f32.mrb[0].mxu0
      %v491 = vadd.f32 %v328, %v490
      %v492 = vpop.f32.mrb[0].mxu0
      %v493 = vpop.f32.mrb[0].mxu0
      %v494 = vadd.f32 %v328, %v493
      %v495 = vpop.f32.mrb[0].mxu0
      %496 = vdwg.mxu0
      %vm497 = vcmp.gt.f32.partialorder %v435, 0.0
      %vm498 = vcmp.gt.f32.partialorder %v438, 0.0
      %vm499 = vcmp.gt.f32.partialorder %v443, 0.0
      %vm500 = vcmp.gt.f32.partialorder %v446, 0.0
      %vm501 = vcmp.gt.f32.partialorder %v451, 0.0
      %vm502 = vcmp.gt.f32.partialorder %v454, 0.0
      %vm503 = vcmp.gt.f32.partialorder %v459, 0.0
      %vm504 = vcmp.gt.f32.partialorder %v462, 0.0
      %vm505 = vcmp.gt.f32.partialorder %v467, 0.0
      %vm506 = vcmp.gt.f32.partialorder %v470, 0.0
      %vm507 = vcmp.gt.f32.partialorder %v475, 0.0
      %vm508 = vcmp.gt.f32.partialorder %v478, 0.0
      %vm509 = vcmp.gt.f32.partialorder %v483, 0.0
      %vm510 = vcmp.gt.f32.partialorder %v486, 0.0
      %vm511 = vcmp.gt.f32.partialorder %v491, 0.0
      %vm512 = vcmp.gt.f32.partialorder %v494, 0.0
      %v513 = vmul.f32 %v435, 0.2
      %v514 = vmul.f32 %v438, 0.2
      %v515 = vmul.f32 %v443, 0.2
      %v516 = vmul.f32 %v446, 0.2
      %v517 = vmul.f32 %v451, 0.2
      %v518 = vmul.f32 %v454, 0.2
      %v519 = vmul.f32 %v459, 0.2
      %v520 = vmul.f32 %v462, 0.2
      %v521 = vmul.f32 %v467, 0.2
      %v522 = vmul.f32 %v470, 0.2
      %v523 = vmul.f32 %v475, 0.2
      %v524 = vmul.f32 %v478, 0.2
      %v525 = vmul.f32 %v483, 0.2
      %v526 = vmul.f32 %v486, 0.2
      %v527 = vmul.f32 %v491, 0.2
      %v528 = vmul.f32 %v494, 0.2
      %v529 = vsel %vm497, %v435, %v513
      %v530 = vsel %vm498, %v438, %v514
      %v531 = vsel %vm499, %v443, %v515
      %v532 = vsel %vm500, %v446, %v516
      %v533 = vsel %vm501, %v451, %v517
      %v534 = vsel %vm502, %v454, %v518
      %v535 = vsel %vm503, %v459, %v519
      %v536 = vsel %vm504, %v462, %v520
      %v537 = vsel %vm505, %v467, %v521
      %v538 = vsel %vm506, %v470, %v522
      %v539 = vsel %vm507, %v475, %v523
      %v540 = vsel %vm508, %v478, %v524
      %v541 = vsel %vm509, %v483, %v525
      %v542 = vsel %vm510, %v486, %v526
      %v543 = vsel %vm511, %v491, %v527
      %v544 = vsel %vm512, %v494, %v528
      %v545 = vlaneseq
      %v546 = vshrl.u32 %v545, 7
      %v547 = vsub.s32 1, %v546
      %v548 = vrot.slane %v322, %v547
      %v549 = vmul.f32 %v529, %v548
      %v550 = vmul.f32 %v530, %v548
      %v551 = vmul.f32 %v531, %v548
      %v552 = vmul.f32 %v532, %v548
      %v553 = vmul.f32 %v533, %v548
      %v554 = vmul.f32 %v534, %v548
      %v555 = vmul.f32 %v535, %v548
      %v556 = vmul.f32 %v536, %v548
      %v557 = vmul.f32 %v537, %v548
      %v558 = vmul.f32 %v538, %v548
      %v559 = vmul.f32 %v539, %v548
      %v560 = vmul.f32 %v540, %v548
      %v561 = vmul.f32 %v541, %v548
      %v562 = vmul.f32 %v542, %v548
      %v563 = vmul.f32 %v543, %v548
      %v564 = vmul.f32 %v544, %v548
      %vm565 = vcmask 15360
      %v566 = vsel %vm565, %v549, 0.0
      %567 = vadd.xlane.f32.xlu0 %v566
      %v568 = vpop.xlane.xlu0 %567
      %v569 = vsel %vm565, %v550, 0.0
      %570 = vadd.xlane.f32.xlu0 %v569
      %v571 = vpop.xlane.xlu0 %570
      %v572 = vsel %vm565, %v551, 0.0
      %573 = vadd.xlane.f32.xlu0 %v572
      %v574 = vpop.xlane.xlu0 %573
      %v575 = vsel %vm565, %v552, 0.0
      %576 = vadd.xlane.f32.xlu0 %v575
      %v577 = vpop.xlane.xlu0 %576
      %v578 = vsel %vm565, %v553, 0.0
      %579 = vadd.xlane.f32.xlu0 %v578
      %v580 = vpop.xlane.xlu0 %579
      %v581 = vsel %vm565, %v554, 0.0
      %582 = vadd.xlane.f32.xlu0 %v581
      %v583 = vpop.xlane.xlu0 %582
      %v584 = vsel %vm565, %v555, 0.0
      %585 = vadd.xlane.f32.xlu0 %v584
      %v586 = vpop.xlane.xlu0 %585
      %v587 = vsel %vm565, %v556, 0.0
      %588 = vadd.xlane.f32.xlu0 %v587
      %v589 = vpop.xlane.xlu0 %588
      %v590 = vsel %vm565, %v557, 0.0
      %591 = vadd.xlane.f32.xlu0 %v590
      %v592 = vpop.xlane.xlu0 %591
      %v593 = vsel %vm565, %v558, 0.0
      %594 = vadd.xlane.f32.xlu0 %v593
      %v595 = vpop.xlane.xlu0 %594
      %v596 = vsel %vm565, %v559, 0.0
      %597 = vadd.xlane.f32.xlu0 %v596
      %v598 = vpop.xlane.xlu0 %597
      %v599 = vsel %vm565, %v560, 0.0
      %600 = vadd.xlane.f32.xlu0 %v599
      %v601 = vpop.xlane.xlu0 %600
      %v602 = vsel %vm565, %v561, 0.0
      %603 = vadd.xlane.f32.xlu0 %v602
      %v604 = vpop.xlane.xlu0 %603
      %v605 = vsel %vm565, %v562, 0.0
      %606 = vadd.xlane.f32.xlu0 %v605
      %v607 = vpop.xlane.xlu0 %606
      %v608 = vsel %vm565, %v563, 0.0
      %609 = vadd.xlane.f32.xlu0 %v608
      %v610 = vpop.xlane.xlu0 %609
      %v611 = vsel %vm565, %v564, 0.0
      %612 = vadd.xlane.f32.xlu0 %v611
      %v613 = vpop.xlane.xlu0 %612
      %s614 = sld [smem:[#allocation2]]
      %v615 = vstv %s614
      %v616 = vadd.f32 %v568, %v615
      %v617 = vadd.f32 %v571, %v615
      %v618 = vadd.f32 %v574, %v615
      %v619 = vadd.f32 %v577, %v615
      %v620 = vadd.f32 %v580, %v615
      %v621 = vadd.f32 %v583, %v615
      %v622 = vadd.f32 %v586, %v615
      %v623 = vadd.f32 %v589, %v615
      %v624 = vadd.f32 %v592, %v615
      %v625 = vadd.f32 %v595, %v615
      %v626 = vadd.f32 %v598, %v615
      %v627 = vadd.f32 %v601, %v615
      %v628 = vadd.f32 %v604, %v615
      %v629 = vadd.f32 %v607, %v615
      %v630 = vadd.f32 %v610, %v615
      %v631 = vadd.f32 %v613, %v615
      %v632 = vsub.f32 0.0, %v616
      %v633 = vsub.f32 0.0, %v617
      %v634 = vsub.f32 0.0, %v618
      %v635 = vsub.f32 0.0, %v619
      %v636 = vsub.f32 0.0, %v620
      %v637 = vsub.f32 0.0, %v621
      %v638 = vsub.f32 0.0, %v622
      %v639 = vsub.f32 0.0, %v623
      %v640 = vsub.f32 0.0, %v624
      %v641 = vsub.f32 0.0, %v625
      %v642 = vsub.f32 0.0, %v626
      %v643 = vsub.f32 0.0, %v627
      %v644 = vsub.f32 0.0, %v628
      %v645 = vsub.f32 0.0, %v629
      %v646 = vsub.f32 0.0, %v630
      %v647 = vsub.f32 0.0, %v631
      %v648 = vmul.f32 %v632, 1.442695
      %v649 = vpow.pop %v648
      %v650 = vmul.f32 %v633, 1.442695
      %v651 = vpow.pop %v650
      %v652 = vmul.f32 %v634, 1.442695
      %v653 = vpow.pop %v652
      %v654 = vmul.f32 %v635, 1.442695
      %v655 = vpow.pop %v654
      %v656 = vmul.f32 %v636, 1.442695
      %v657 = vpow.pop %v656
      %v658 = vmul.f32 %v637, 1.442695
      %v659 = vpow.pop %v658
      %v660 = vmul.f32 %v638, 1.442695
      %v661 = vpow.pop %v660
      %v662 = vmul.f32 %v639, 1.442695
      %v663 = vpow.pop %v662
      %v664 = vmul.f32 %v640, 1.442695
      %v665 = vpow.pop %v664
      %v666 = vmul.f32 %v641, 1.442695
      %v667 = vpow.pop %v666
      %v668 = vmul.f32 %v642, 1.442695
      %v669 = vpow.pop %v668
      %v670 = vmul.f32 %v643, 1.442695
      %v671 = vpow.pop %v670
      %v672 = vmul.f32 %v644, 1.442695
      %v673 = vpow.pop %v672
      %v674 = vmul.f32 %v645, 1.442695
      %v675 = vpow.pop %v674
      %v676 = vmul.f32 %v646, 1.442695
      %v677 = vpow.pop %v676
      %v678 = vmul.f32 %v647, 1.442695
      %v679 = vpow.pop %v678
      %v680 = vadd.f32 %v649, 1.0
      %v681 = vadd.f32 %v651, 1.0
      %v682 = vadd.f32 %v653, 1.0
      %v683 = vadd.f32 %v655, 1.0
      %v684 = vadd.f32 %v657, 1.0
      %v685 = vadd.f32 %v659, 1.0
      %v686 = vadd.f32 %v661, 1.0
      %v687 = vadd.f32 %v663, 1.0
      %v688 = vadd.f32 %v665, 1.0
      %v689 = vadd.f32 %v667, 1.0
      %v690 = vadd.f32 %v669, 1.0
      %v691 = vadd.f32 %v671, 1.0
      %v692 = vadd.f32 %v673, 1.0
      %v693 = vadd.f32 %v675, 1.0
      %v694 = vadd.f32 %v677, 1.0
      %v695 = vadd.f32 %v679, 1.0
      %v696 = vrcp.pop %v680
      %v697 = vrcp.pop %v681
      %v698 = vrcp.pop %v682
      %v699 = vrcp.pop %v683
      %v700 = vrcp.pop %v684
      %v701 = vrcp.pop %v685
      %v702 = vrcp.pop %v686
      %v703 = vrcp.pop %v687
      %v704 = vrcp.pop %v688
      %v705 = vrcp.pop %v689
      %v706 = vrcp.pop %v690
      %v707 = vrcp.pop %v691
      %v708 = vrcp.pop %v692
      %v709 = vrcp.pop %v693
      %v710 = vrcp.pop %v694
      %v711 = vrcp.pop %v695
      %v712 = vld [vmem:[%s297] sm:$0xf]
      %v713 = vld [vmem:[%s297 + $0x4] sm:$0xf]
      %v714 = vld [vmem:[%s297 + $0x8] sm:$0xf]
      %v715 = vld [vmem:[%s297 + $0xc] sm:$0xf]
      %v716 = vld [vmem:[%s297 + $0x10] sm:$0xf]
      %v717 = vld [vmem:[%s297 + $0x14] sm:$0xf]
      %v718 = vld [vmem:[%s297 + $0x18] sm:$0xf]
      %v719 = vld [vmem:[%s297 + $0x1c] sm:$0xf]
      %v720 = vld [vmem:[%s297 + $0x20] sm:$0xf]
      %v721 = vld [vmem:[%s297 + $0x24] sm:$0xf]
      %v722 = vld [vmem:[%s297 + $0x28] sm:$0xf]
      %v723 = vld [vmem:[%s297 + $0x2c] sm:$0xf]
      %v724 = vld [vmem:[%s297 + $0x30] sm:$0xf]
      %v725 = vld [vmem:[%s297 + $0x34] sm:$0xf]
      %v726 = vld [vmem:[%s297 + $0x38] sm:$0xf]
      %v727 = vld [vmem:[%s297 + $0x3c] sm:$0xf]
      %v728 = vunpack.c.l.bf16 %v712
      %v729 = vunpack.c.l.bf16 %v713
      %v730 = vunpack.c.l.bf16 %v714
      %v731 = vunpack.c.l.bf16 %v715
      %v732 = vunpack.c.l.bf16 %v716
      %v733 = vunpack.c.l.bf16 %v717
      %v734 = vunpack.c.l.bf16 %v718
      %v735 = vunpack.c.l.bf16 %v719
      %v736 = vunpack.c.l.bf16 %v720
      %v737 = vunpack.c.l.bf16 %v721
      %v738 = vunpack.c.l.bf16 %v722
      %v739 = vunpack.c.l.bf16 %v723
      %v740 = vunpack.c.l.bf16 %v724
      %v741 = vunpack.c.l.bf16 %v725
      %v742 = vunpack.c.l.bf16 %v726
      %v743 = vunpack.c.l.bf16 %v727
      %v744 = vld [vmem:[%s5] sm:$0xf]
      %v745 = vld [vmem:[%s5 + $0x4] sm:$0xf]
      %v748 = vunpack.c.l.b16 %v744
      %v749 = vunpack.c.l.b16 %v745
      %v750 = vpack.c.b16 %v749, %v748
      %752 = vmatprep.subr.bf16.mxu0 0
      %753 = vmatpush1.bf16.msra.mxu0 %v750
      %754 = vmatprep.subr.bf16.mxu0 0
      %755 = vmatpush1.bf16.msra.mxu0 0
      %756 = vmatprep.subr.bf16.mxu0 0
      %757 = vmatpush1.bf16.msra.mxu0 0
      %758 = vmatprep.subr.bf16.mxu0 0
      %759 = vmatpush1.bf16.msra.mxu0 0
      %760 = vmatprep.subr.bf16.mxu0 0
      %761 = vmatpush1.bf16.msra.mxu0 0
      %762 = vmatprep.subr.bf16.mxu0 0
      %763 = vmatpush1.bf16.msra.mxu0 0
      %764 = vmatprep.subr.bf16.mxu0 0
      %765 = vmatpush1.bf16.msra.mxu0 0
      %766 = vmatprep.subr.bf16.mxu0 0
      %767 = vmatpush1.bf16.msra.mxu0 0
      %768 = vmatprep.subr.bf16.mxu0 0
      %769 = vmatpush1.bf16.msra.mxu0 0
      %770 = vmatprep.subr.bf16.mxu0 0
      %771 = vmatpush1.bf16.msra.mxu0 0
      %772 = vmatprep.subr.bf16.mxu0 0
      %773 = vmatpush1.bf16.msra.mxu0 0
      %774 = vmatprep.subr.bf16.mxu0 0
      %775 = vmatpush1.bf16.msra.mxu0 0
      %776 = vmatprep.subr.bf16.mxu0 0
      %777 = vmatpush1.bf16.msra.mxu0 0
      %778 = vmatprep.subr.bf16.mxu0 0
      %779 = vmatpush1.bf16.msra.mxu0 0
      %780 = vmatprep.subr.bf16.mxu0 0
      %781 = vmatpush1.bf16.msra.mxu0 0
      %782 = vmatprep.subr.bf16.mxu0 0
      %783 = vmatpush1.bf16.msra.mxu0 0
      %784 = vmatprep.mubr.bf16.mxu0 0
      %785 = vmatmul.mubr.bf16.gmra.mrb[0].mxu0 %v377
      %v786 = vpop.f32.mrb[0].mxu0
      %v787 = vadd.f32 0.0, %v786
      %v788 = vpop.f32.mrb[0].mxu0
      %v789 = vpop.f32.mrb[0].mxu0
      %v790 = vadd.f32 0.0, %v789
      %v791 = vpop.f32.mrb[0].mxu0
      %792 = vmatprep.mubr.bf16.mxu0 0
      %793 = vmatmul.mubr.bf16.gmra.mrb[0].mxu0 %v380
      %v794 = vpop.f32.mrb[0].mxu0
      %v795 = vadd.f32 0.0, %v794
      %v796 = vpop.f32.mrb[0].mxu0
      %v797 = vpop.f32.mrb[0].mxu0
      %v798 = vadd.f32 0.0, %v797
      %v799 = vpop.f32.mrb[0].mxu0
      %800 = vmatprep.mubr.bf16.mxu0 0
      %801 = vmatmul.mubr.bf16.gmra.mrb[0].mxu0 %v383
      %v802 = vpop.f32.mrb[0].mxu0
      %v803 = vadd.f32 0.0, %v802
      %v804 = vpop.f32.mrb[0].mxu0
      %v805 = vpop.f32.mrb[0].mxu0
      %v806 = vadd.f32 0.0, %v805
      %v807 = vpop.f32.mrb[0].mxu0
      %808 = vmatprep.mubr.bf16.mxu0 0
      %809 = vmatmul.mubr.bf16.gmra.mrb[0].mxu0 %v386
      %v810 = vpop.f32.mrb[0].mxu0
      %v811 = vadd.f32 0.0, %v810
      %v812 = vpop.f32.mrb[0].mxu0
      %v813 = vpop.f32.mrb[0].mxu0
      %v814 = vadd.f32 0.0, %v813
      %v815 = vpop.f32.mrb[0].mxu0
      %816 = vmatprep.mubr.bf16.mxu0 0
      %817 = vmatmul.mubr.bf16.gmra.mrb[0].mxu0 %v389
      %v818 = vpop.f32.mrb[0].mxu0
      %v819 = vadd.f32 0.0, %v818
      %v820 = vpop.f32.mrb[0].mxu0
      %v821 = vpop.f32.mrb[0].mxu0
      %v822 = vadd.f32 0.0, %v821
      %v823 = vpop.f32.mrb[0].mxu0
      %824 = vmatprep.mubr.bf16.mxu0 0
      %825 = vmatmul.mubr.bf16.gmra.mrb[0].mxu0 %v392
      %v826 = vpop.f32.mrb[0].mxu0
      %v827 = vadd.f32 0.0, %v826
      %v828 = vpop.f32.mrb[0].mxu0
      %v829 = vpop.f32.mrb[0].mxu0
      %v830 = vadd.f32 0.0, %v829
      %v831 = vpop.f32.mrb[0].mxu0
      %832 = vmatprep.mubr.bf16.mxu0 0
      %833 = vmatmul.mubr.bf16.gmra.mrb[0].mxu0 %v395
      %v834 = vpop.f32.mrb[0].mxu0
      %v835 = vadd.f32 0.0, %v834
      %v836 = vpop.f32.mrb[0].mxu0
      %v837 = vpop.f32.mrb[0].mxu0
      %v838 = vadd.f32 0.0, %v837
      %v839 = vpop.f32.mrb[0].mxu0
      %840 = vmatprep.mubr.bf16.mxu0 0
      %841 = vmatmul.mubr.bf16.gmra.mrb[0].mxu0 %v398
      %v842 = vpop.f32.mrb[0].mxu0
      %v843 = vadd.f32 0.0, %v842
      %v844 = vpop.f32.mrb[0].mxu0
      %v845 = vpop.f32.mrb[0].mxu0
      %v846 = vadd.f32 0.0, %v845
      %v847 = vpop.f32.mrb[0].mxu0
      %848 = vdwg.mxu0
      %v849 = vmul.f32 %v696, %v787
      %v850 = vmul.f32 %v697, %v790
      %v851 = vmul.f32 %v698, %v795
      %v852 = vmul.f32 %v699, %v798
      %v853 = vmul.f32 %v700, %v803
      %v854 = vmul.f32 %v701, %v806
      %v855 = vmul.f32 %v702, %v811
      %v856 = vmul.f32 %v703, %v814
      %v857 = vmul.f32 %v704, %v819
      %v858 = vmul.f32 %v705, %v822
      %v859 = vmul.f32 %v706, %v827
      %v860 = vmul.f32 %v707, %v830
      %v861 = vmul.f32 %v708, %v835
      %v862 = vmul.f32 %v709, %v838
      %v863 = vmul.f32 %v710, %v843
      %v864 = vmul.f32 %v711, %v846
      %s865 = scalar_lea.vmem %s5, 8
      %v866 = vld [vmem:[%s865] sm:$0xf]
      %v867 = vld [vmem:[%s865 + $0x4] sm:$0xf]
      %v870 = vunpack.c.l.b16 %v866
      %v871 = vunpack.c.l.b16 %v867
      %v872 = vpack.c.b16 %v871, %v870
      %874 = vmatprep.subr.bf16.mxu0 0
      %875 = vmatpush1.bf16.msra.mxu0 %v872
      %876 = vmatprep.subr.bf16.mxu0 0
      %877 = vmatpush1.bf16.msra.mxu0 0
      %878 = vmatprep.subr.bf16.mxu0 0
      %879 = vmatpush1.bf16.msra.mxu0 0
      %880 = vmatprep.subr.bf16.mxu0 0
      %881 = vmatpush1.bf16.msra.mxu0 0
      %882 = vmatprep.subr.bf16.mxu0 0
      %883 = vmatpush1.bf16.msra.mxu0 0
      %884 = vmatprep.subr.bf16.mxu0 0
      %885 = vmatpush1.bf16.msra.mxu0 0
      %886 = vmatprep.subr.bf16.mxu0 0
      %887 = vmatpush1.bf16.msra.mxu0 0
      %888 = vmatprep.subr.bf16.mxu0 0
      %889 = vmatpush1.bf16.msra.mxu0 0
      %890 = vmatprep.subr.bf16.mxu0 0
      %891 = vmatpush1.bf16.msra.mxu0 0
      %892 = vmatprep.subr.bf16.mxu0 0
      %893 = vmatpush1.bf16.msra.mxu0 0
      %894 = vmatprep.subr.bf16.mxu0 0
      %895 = vmatpush1.bf16.msra.mxu0 0
      %896 = vmatprep.subr.bf16.mxu0 0
      %897 = vmatpush1.bf16.msra.mxu0 0
      %898 = vmatprep.subr.bf16.mxu0 0
      %899 = vmatpush1.bf16.msra.mxu0 0
      %900 = vmatprep.subr.bf16.mxu0 0
      %901 = vmatpush1.bf16.msra.mxu0 0
      %902 = vmatprep.subr.bf16.mxu0 0
      %903 = vmatpush1.bf16.msra.mxu0 0
      %904 = vmatprep.subr.bf16.mxu0 0
      %905 = vmatpush1.bf16.msra.mxu0 0
      %906 = vmatprep.mubr.bf16.mxu0 0
      %907 = vmatmul.mubr.bf16.gmra.mrb[0].mxu0 %v377
      %v908 = vpop.f32.mrb[0].mxu0
      %v909 = vadd.f32 0.0, %v908
      %v910 = vpop.f32.mrb[0].mxu0
      %v911 = vpop.f32.mrb[0].mxu0
      %v912 = vadd.f32 0.0, %v911
      %v913 = vpop.f32.mrb[0].mxu0
      %914 = vmatprep.mubr.bf16.mxu0 0
      %915 = vmatmul.mubr.bf16.gmra.mrb[0].mxu0 %v380
      %v916 = vpop.f32.mrb[0].mxu0
      %v917 = vadd.f32 0.0, %v916
      %v918 = vpop.f32.mrb[0].mxu0
      %v919 = vpop.f32.mrb[0].mxu0
      %v920 = vadd.f32 0.0, %v919
      %v921 = vpop.f32.mrb[0].mxu0
      %922 = vmatprep.mubr.bf16.mxu0 0
      %923 = vmatmul.mubr.bf16.gmra.mrb[0].mxu0 %v383
      %v924 = vpop.f32.mrb[0].mxu0
      %v925 = vadd.f32 0.0, %v924
      %v926 = vpop.f32.mrb[0].mxu0
      %v927 = vpop.f32.mrb[0].mxu0
      %v928 = vadd.f32 0.0, %v927
      %v929 = vpop.f32.mrb[0].mxu0
      %930 = vmatprep.mubr.bf16.mxu0 0
      %931 = vmatmul.mubr.bf16.gmra.mrb[0].mxu0 %v386
      %v932 = vpop.f32.mrb[0].mxu0
      %v933 = vadd.f32 0.0, %v932
      %v934 = vpop.f32.mrb[0].mxu0
      %v935 = vpop.f32.mrb[0].mxu0
      %v936 = vadd.f32 0.0, %v935
      %v937 = vpop.f32.mrb[0].mxu0
      %938 = vmatprep.mubr.bf16.mxu0 0
      %939 = vmatmul.mubr.bf16.gmra.mrb[0].mxu0 %v389
      %v940 = vpop.f32.mrb[0].mxu0
      %v941 = vadd.f32 0.0, %v940
      %v942 = vpop.f32.mrb[0].mxu0
      %v943 = vpop.f32.mrb[0].mxu0
      %v944 = vadd.f32 0.0, %v943
      %v945 = vpop.f32.mrb[0].mxu0
      %946 = vmatprep.mubr.bf16.mxu0 0
      %947 = vmatmul.mubr.bf16.gmra.mrb[0].mxu0 %v392
      %v948 = vpop.f32.mrb[0].mxu0
      %v949 = vadd.f32 0.0, %v948
      %v950 = vpop.f32.mrb[0].mxu0
      %v951 = vpop.f32.mrb[0].mxu0
      %v952 = vadd.f32 0.0, %v951
      %v953 = vpop.f32.mrb[0].mxu0
      %954 = vmatprep.mubr.bf16.mxu0 0
      %955 = vmatmul.mubr.bf16.gmra.mrb[0].mxu0 %v395
      %v956 = vpop.f32.mrb[0].mxu0
      %v957 = vadd.f32 0.0, %v956
      %v958 = vpop.f32.mrb[0].mxu0
      %v959 = vpop.f32.mrb[0].mxu0
      %v960 = vadd.f32 0.0, %v959
      %v961 = vpop.f32.mrb[0].mxu0
      %962 = vmatprep.mubr.bf16.mxu0 0
      %963 = vmatmul.mubr.bf16.gmra.mrb[0].mxu0 %v398
      %v964 = vpop.f32.mrb[0].mxu0
      %v965 = vadd.f32 0.0, %v964
      %v966 = vpop.f32.mrb[0].mxu0
      %v967 = vpop.f32.mrb[0].mxu0
      %v968 = vadd.f32 0.0, %v967
      %v969 = vpop.f32.mrb[0].mxu0
      %970 = vdwg.mxu0
      %972 = vset.pattern.permute.xlu0 0
      %973 = vperm.xlu0 %972, %v728
      %v974 = vpop.permute.xlu0 %973
      %977 = vset.pattern.permute.xlu0 0
      %978 = vperm.xlu0 %977, %v729
      %v979 = vpop.permute.xlu0 %978
      %982 = vset.pattern.permute.xlu0 0
      %983 = vperm.xlu0 %982, %v730
      %v984 = vpop.permute.xlu0 %983
      %987 = vset.pattern.permute.xlu0 0
      %988 = vperm.xlu0 %987, %v731
      %v989 = vpop.permute.xlu0 %988
      %992 = vset.pattern.permute.xlu0 0
      %993 = vperm.xlu0 %992, %v732
      %v994 = vpop.permute.xlu0 %993
      %997 = vset.pattern.permute.xlu0 0
      %998 = vperm.xlu0 %997, %v733
      %v999 = vpop.permute.xlu0 %998
      %1002 = vset.pattern.permute.xlu0 0
      %1003 = vperm.xlu0 %1002, %v734
      %v1004 = vpop.permute.xlu0 %1003
      %1007 = vset.pattern.permute.xlu0 0
      %1008 = vperm.xlu0 %1007, %v735
      %v1009 = vpop.permute.xlu0 %1008
      %1012 = vset.pattern.permute.xlu0 0
      %1013 = vperm.xlu0 %1012, %v736
      %v1014 = vpop.permute.xlu0 %1013
      %1017 = vset.pattern.permute.xlu0 0
      %1018 = vperm.xlu0 %1017, %v737
      %v1019 = vpop.permute.xlu0 %1018
      %1022 = vset.pattern.permute.xlu0 0
      %1023 = vperm.xlu0 %1022, %v738
      %v1024 = vpop.permute.xlu0 %1023
      %1027 = vset.pattern.permute.xlu0 0
      %1028 = vperm.xlu0 %1027, %v739
      %v1029 = vpop.permute.xlu0 %1028
      %1032 = vset.pattern.permute.xlu0 0
      %1033 = vperm.xlu0 %1032, %v740
      %v1034 = vpop.permute.xlu0 %1033
      %1037 = vset.pattern.permute.xlu0 0
      %1038 = vperm.xlu0 %1037, %v741
      %v1039 = vpop.permute.xlu0 %1038
      %1042 = vset.pattern.permute.xlu0 0
      %1043 = vperm.xlu0 %1042, %v742
      %v1044 = vpop.permute.xlu0 %1043
      %1047 = vset.pattern.permute.xlu0 0
      %1048 = vperm.xlu0 %1047, %v743
      %v1049 = vpop.permute.xlu0 %1048
      %v1051 = vmul.f32 %v974, %v909
      %v1052 = vmul.f32 %v979, %v912
      %v1053 = vmul.f32 %v984, %v917
      %v1054 = vmul.f32 %v989, %v920
      %v1055 = vmul.f32 %v994, %v925
      %v1056 = vmul.f32 %v999, %v928
      %v1057 = vmul.f32 %v1004, %v933
      %v1058 = vmul.f32 %v1009, %v936
      %v1059 = vmul.f32 %v1014, %v941
      %v1060 = vmul.f32 %v1019, %v944
      %v1061 = vmul.f32 %v1024, %v949
      %v1062 = vmul.f32 %v1029, %v952
      %v1063 = vmul.f32 %v1034, %v957
      %v1064 = vmul.f32 %v1039, %v960
      %v1065 = vmul.f32 %v1044, %v965
      %v1066 = vmul.f32 %v1049, %v968
      %v1067 = vadd.f32 %v849, %v1051
      %v1068 = vadd.f32 %v850, %v1052
      %v1069 = vadd.f32 %v851, %v1053
      %v1070 = vadd.f32 %v852, %v1054
      %v1071 = vadd.f32 %v853, %v1055
      %v1072 = vadd.f32 %v854, %v1056
      %v1073 = vadd.f32 %v855, %v1057
      %v1074 = vadd.f32 %v856, %v1058
      %v1075 = vadd.f32 %v857, %v1059
      %v1076 = vadd.f32 %v858, %v1060
      %v1077 = vadd.f32 %v859, %v1061
      %v1078 = vadd.f32 %v860, %v1062
      %v1079 = vadd.f32 %v861, %v1063
      %v1080 = vadd.f32 %v862, %v1064
      %v1081 = vadd.f32 %v863, %v1065
      %v1082 = vadd.f32 %v864, %v1066
      %s1083 = scalar_lea.vmem %s5, 16
      %v1084 = vld [vmem:[%s1083] sm:$0xf]
      %v1085 = vld [vmem:[%s1083 + $0x4] sm:$0xf]
      %v1088 = vunpack.c.l.b16 %v1084
      %v1089 = vunpack.c.l.b16 %v1085
      %v1090 = vpack.c.b16 %v1089, %v1088
      %1092 = vmatprep.subr.bf16.mxu0 0
      %1093 = vmatpush1.bf16.msra.mxu0 %v1090
      %1094 = vmatprep.subr.bf16.mxu0 0
      %1095 = vmatpush1.bf16.msra.mxu0 0
      %1096 = vmatprep.subr.bf16.mxu0 0
      %1097 = vmatpush1.bf16.msra.mxu0 0
      %1098 = vmatprep.subr.bf16.mxu0 0
      %1099 = vmatpush1.bf16.msra.mxu0 0
      %1100 = vmatprep.subr.bf16.mxu0 0
      %1101 = vmatpush1.bf16.msra.mxu0 0
      %1102 = vmatprep.subr.bf16.mxu0 0
      %1103 = vmatpush1.bf16.msra.mxu0 0
      %1104 = vmatprep.subr.bf16.mxu0 0
      %1105 = vmatpush1.bf16.msra.mxu0 0
      %1106 = vmatprep.subr.bf16.mxu0 0
      %1107 = vmatpush1.bf16.msra.mxu0 0
      %1108 = vmatprep.subr.bf16.mxu0 0
      %1109 = vmatpush1.bf16.msra.mxu0 0
      %1110 = vmatprep.subr.bf16.mxu0 0
      %1111 = vmatpush1.bf16.msra.mxu0 0
      %1112 = vmatprep.subr.bf16.mxu0 0
      %1113 = vmatpush1.bf16.msra.mxu0 0
      %1114 = vmatprep.subr.bf16.mxu0 0
      %1115 = vmatpush1.bf16.msra.mxu0 0
      %1116 = vmatprep.subr.bf16.mxu0 0
      %1117 = vmatpush1.bf16.msra.mxu0 0
      %1118 = vmatprep.subr.bf16.mxu0 0
      %1119 = vmatpush1.bf16.msra.mxu0 0
      %1120 = vmatprep.subr.bf16.mxu0 0
      %1121 = vmatpush1.bf16.msra.mxu0 0
      %1122 = vmatprep.subr.bf16.mxu0 0
      %1123 = vmatpush1.bf16.msra.mxu0 0
      %1124 = vmatprep.mubr.bf16.mxu0 0
      %1125 = vmatmul.mubr.bf16.gmra.mrb[0].mxu0 %v377
      %v1126 = vpop.f32.mrb[0].mxu0
      %v1127 = vadd.f32 0.0, %v1126
      %v1128 = vpop.f32.mrb[0].mxu0
      %v1129 = vpop.f32.mrb[0].mxu0
      %v1130 = vadd.f32 0.0, %v1129
      %v1131 = vpop.f32.mrb[0].mxu0
      %1132 = vmatprep.mubr.bf16.mxu0 0
      %1133 = vmatmul.mubr.bf16.gmra.mrb[0].mxu0 %v380
      %v1134 = vpop.f32.mrb[0].mxu0
      %v1135 = vadd.f32 0.0, %v1134
      %v1136 = vpop.f32.mrb[0].mxu0
      %v1137 = vpop.f32.mrb[0].mxu0
      %v1138 = vadd.f32 0.0, %v1137
      %v1139 = vpop.f32.mrb[0].mxu0
      %1140 = vmatprep.mubr.bf16.mxu0 0
      %1141 = vmatmul.mubr.bf16.gmra.mrb[0].mxu0 %v383
      %v1142 = vpop.f32.mrb[0].mxu0
      %v1143 = vadd.f32 0.0, %v1142
      %v1144 = vpop.f32.mrb[0].mxu0
      %v1145 = vpop.f32.mrb[0].mxu0
      %v1146 = vadd.f32 0.0, %v1145
      %v1147 = vpop.f32.mrb[0].mxu0
      %1148 = vmatprep.mubr.bf16.mxu0 0
      %1149 = vmatmul.mubr.bf16.gmra.mrb[0].mxu0 %v386
      %v1150 = vpop.f32.mrb[0].mxu0
      %v1151 = vadd.f32 0.0, %v1150
      %v1152 = vpop.f32.mrb[0].mxu0
      %v1153 = vpop.f32.mrb[0].mxu0
      %v1154 = vadd.f32 0.0, %v1153
      %v1155 = vpop.f32.mrb[0].mxu0
      %1156 = vmatprep.mubr.bf16.mxu0 0
      %1157 = vmatmul.mubr.bf16.gmra.mrb[0].mxu0 %v389
      %v1158 = vpop.f32.mrb[0].mxu0
      %v1159 = vadd.f32 0.0, %v1158
      %v1160 = vpop.f32.mrb[0].mxu0
      %v1161 = vpop.f32.mrb[0].mxu0
      %v1162 = vadd.f32 0.0, %v1161
      %v1163 = vpop.f32.mrb[0].mxu0
      %1164 = vmatprep.mubr.bf16.mxu0 0
      %1165 = vmatmul.mubr.bf16.gmra.mrb[0].mxu0 %v392
      %v1166 = vpop.f32.mrb[0].mxu0
      %v1167 = vadd.f32 0.0, %v1166
      %v1168 = vpop.f32.mrb[0].mxu0
      %v1169 = vpop.f32.mrb[0].mxu0
      %v1170 = vadd.f32 0.0, %v1169
      %v1171 = vpop.f32.mrb[0].mxu0
      %1172 = vmatprep.mubr.bf16.mxu0 0
      %1173 = vmatmul.mubr.bf16.gmra.mrb[0].mxu0 %v395
      %v1174 = vpop.f32.mrb[0].mxu0
      %v1175 = vadd.f32 0.0, %v1174
      %v1176 = vpop.f32.mrb[0].mxu0
      %v1177 = vpop.f32.mrb[0].mxu0
      %v1178 = vadd.f32 0.0, %v1177
      %v1179 = vpop.f32.mrb[0].mxu0
      %1180 = vmatprep.mubr.bf16.mxu0 0
      %1181 = vmatmul.mubr.bf16.gmra.mrb[0].mxu0 %v398
      %v1182 = vpop.f32.mrb[0].mxu0
      %v1183 = vadd.f32 0.0, %v1182
      %v1184 = vpop.f32.mrb[0].mxu0
      %v1185 = vpop.f32.mrb[0].mxu0
      %v1186 = vadd.f32 0.0, %v1185
      %v1187 = vpop.f32.mrb[0].mxu0
      %1188 = vdwg.mxu0
      %1189 = vset.pattern.permute.xlu0 1
      %1190 = vperm.xlu0 %1189, %v728
      %v1191 = vpop.permute.xlu0 %1190
      %1193 = vset.pattern.permute.xlu0 1
      %1194 = vperm.xlu0 %1193, %v729
      %v1195 = vpop.permute.xlu0 %1194
      %1197 = vset.pattern.permute.xlu0 1
      %1198 = vperm.xlu0 %1197, %v730
      %v1199 = vpop.permute.xlu0 %1198
      %1201 = vset.pattern.permute.xlu0 1
      %1202 = vperm.xlu0 %1201, %v731
      %v1203 = vpop.permute.xlu0 %1202
      %1205 = vset.pattern.permute.xlu0 1
      %1206 = vperm.xlu0 %1205, %v732
      %v1207 = vpop.permute.xlu0 %1206
      %1209 = vset.pattern.permute.xlu0 1
      %1210 = vperm.xlu0 %1209, %v733
      %v1211 = vpop.permute.xlu0 %1210
      %1213 = vset.pattern.permute.xlu0 1
      %1214 = vperm.xlu0 %1213, %v734
      %v1215 = vpop.permute.xlu0 %1214
      %1217 = vset.pattern.permute.xlu0 1
      %1218 = vperm.xlu0 %1217, %v735
      %v1219 = vpop.permute.xlu0 %1218
      %1221 = vset.pattern.permute.xlu0 1
      %1222 = vperm.xlu0 %1221, %v736
      %v1223 = vpop.permute.xlu0 %1222
      %1225 = vset.pattern.permute.xlu0 1
      %1226 = vperm.xlu0 %1225, %v737
      %v1227 = vpop.permute.xlu0 %1226
      %1229 = vset.pattern.permute.xlu0 1
      %1230 = vperm.xlu0 %1229, %v738
      %v1231 = vpop.permute.xlu0 %1230
      %1233 = vset.pattern.permute.xlu0 1
      %1234 = vperm.xlu0 %1233, %v739
      %v1235 = vpop.permute.xlu0 %1234
      %1237 = vset.pattern.permute.xlu0 1
      %1238 = vperm.xlu0 %1237, %v740
      %v1239 = vpop.permute.xlu0 %1238
      %1241 = vset.pattern.permute.xlu0 1
      %1242 = vperm.xlu0 %1241, %v741
      %v1243 = vpop.permute.xlu0 %1242
      %1245 = vset.pattern.permute.xlu0 1
      %1246 = vperm.xlu0 %1245, %v742
      %v1247 = vpop.permute.xlu0 %1246
      %1249 = vset.pattern.permute.xlu0 1
      %1250 = vperm.xlu0 %1249, %v743
      %v1251 = vpop.permute.xlu0 %1250
      %v1253 = vmul.f32 %v1191, %v1127
      %v1254 = vmul.f32 %v1195, %v1130
      %v1255 = vmul.f32 %v1199, %v1135
      %v1256 = vmul.f32 %v1203, %v1138
      %v1257 = vmul.f32 %v1207, %v1143
      %v1258 = vmul.f32 %v1211, %v1146
      %v1259 = vmul.f32 %v1215, %v1151
      %v1260 = vmul.f32 %v1219, %v1154
      %v1261 = vmul.f32 %v1223, %v1159
      %v1262 = vmul.f32 %v1227, %v1162
      %v1263 = vmul.f32 %v1231, %v1167
      %v1264 = vmul.f32 %v1235, %v1170
      %v1265 = vmul.f32 %v1239, %v1175
      %v1266 = vmul.f32 %v1243, %v1178
      %v1267 = vmul.f32 %v1247, %v1183
      %v1268 = vmul.f32 %v1251, %v1186
      %v1269 = vadd.f32 %v1067, %v1253
      %v1270 = vadd.f32 %v1068, %v1254
      %v1271 = vadd.f32 %v1069, %v1255
      %v1272 = vadd.f32 %v1070, %v1256
      %v1273 = vadd.f32 %v1071, %v1257
      %v1274 = vadd.f32 %v1072, %v1258
      %v1275 = vadd.f32 %v1073, %v1259
      %v1276 = vadd.f32 %v1074, %v1260
      %v1277 = vadd.f32 %v1075, %v1261
      %v1278 = vadd.f32 %v1076, %v1262
      %v1279 = vadd.f32 %v1077, %v1263
      %v1280 = vadd.f32 %v1078, %v1264
      %v1281 = vadd.f32 %v1079, %v1265
      %v1282 = vadd.f32 %v1080, %v1266
      %v1283 = vadd.f32 %v1081, %v1267
      %v1284 = vadd.f32 %v1082, %v1268
      %v1285 = vld [vmem:[%s6] sm:$0x1]
      %v1287 = vlaneseq
      %v1288 = vshrl.u32 %v1287, 7
      %v1289 = vsub.s32 0, %v1288
      %v1290 = vrot.slane %v1285, %v1289
      %v1292 = vadd.f32 %v1269, %v1290
      %v1293 = vadd.f32 %v1270, %v1290
      %v1294 = vadd.f32 %v1271, %v1290
      %v1295 = vadd.f32 %v1272, %v1290
      %v1296 = vadd.f32 %v1273, %v1290
      %v1297 = vadd.f32 %v1274, %v1290
      %v1298 = vadd.f32 %v1275, %v1290
      %v1299 = vadd.f32 %v1276, %v1290
      %v1300 = vadd.f32 %v1277, %v1290
      %v1301 = vadd.f32 %v1278, %v1290
      %v1302 = vadd.f32 %v1279, %v1290
      %v1303 = vadd.f32 %v1280, %v1290
      %v1304 = vadd.f32 %v1281, %v1290
      %v1305 = vadd.f32 %v1282, %v1290
      %v1306 = vadd.f32 %v1283, %v1290
      %v1307 = vadd.f32 %v1284, %v1290
      %vm1308 = vcmp.gt.f32.partialorder %v1292, 0.0
      %vm1309 = vcmp.gt.f32.partialorder %v1293, 0.0
      %vm1310 = vcmp.gt.f32.partialorder %v1294, 0.0
      %vm1311 = vcmp.gt.f32.partialorder %v1295, 0.0
      %vm1312 = vcmp.gt.f32.partialorder %v1296, 0.0
      %vm1313 = vcmp.gt.f32.partialorder %v1297, 0.0
      %vm1314 = vcmp.gt.f32.partialorder %v1298, 0.0
      %vm1315 = vcmp.gt.f32.partialorder %v1299, 0.0
      %vm1316 = vcmp.gt.f32.partialorder %v1300, 0.0
      %vm1317 = vcmp.gt.f32.partialorder %v1301, 0.0
      %vm1318 = vcmp.gt.f32.partialorder %v1302, 0.0
      %vm1319 = vcmp.gt.f32.partialorder %v1303, 0.0
      %vm1320 = vcmp.gt.f32.partialorder %v1304, 0.0
      %vm1321 = vcmp.gt.f32.partialorder %v1305, 0.0
      %vm1322 = vcmp.gt.f32.partialorder %v1306, 0.0
      %vm1323 = vcmp.gt.f32.partialorder %v1307, 0.0
      %v1324 = vmul.f32 %v1292, 0.2
      %v1325 = vmul.f32 %v1293, 0.2
      %v1326 = vmul.f32 %v1294, 0.2
      %v1327 = vmul.f32 %v1295, 0.2
      %v1328 = vmul.f32 %v1296, 0.2
      %v1329 = vmul.f32 %v1297, 0.2
      %v1330 = vmul.f32 %v1298, 0.2
      %v1331 = vmul.f32 %v1299, 0.2
      %v1332 = vmul.f32 %v1300, 0.2
      %v1333 = vmul.f32 %v1301, 0.2
      %v1334 = vmul.f32 %v1302, 0.2
      %v1335 = vmul.f32 %v1303, 0.2
      %v1336 = vmul.f32 %v1304, 0.2
      %v1337 = vmul.f32 %v1305, 0.2
      %v1338 = vmul.f32 %v1306, 0.2
      %v1339 = vmul.f32 %v1307, 0.2
      %v1340 = vsel %vm1308, %v1292, %v1324
      %v1341 = vsel %vm1309, %v1293, %v1325
      %v1342 = vsel %vm1310, %v1294, %v1326
      %v1343 = vsel %vm1311, %v1295, %v1327
      %v1344 = vsel %vm1312, %v1296, %v1328
      %v1345 = vsel %vm1313, %v1297, %v1329
      %v1346 = vsel %vm1314, %v1298, %v1330
      %v1347 = vsel %vm1315, %v1299, %v1331
      %v1348 = vsel %vm1316, %v1300, %v1332
      %v1349 = vsel %vm1317, %v1301, %v1333
      %v1350 = vsel %vm1318, %v1302, %v1334
      %v1351 = vsel %vm1319, %v1303, %v1335
      %v1352 = vsel %vm1320, %v1304, %v1336
      %v1353 = vsel %vm1321, %v1305, %v1337
      %v1354 = vsel %vm1322, %v1306, %v1338
      %v1355 = vsel %vm1323, %v1307, %v1339
      %v1356 = vpack.c.bf16 %v1341, %v1340
      %v1357 = vpack.c.bf16 %v1343, %v1342
      %v1358 = vpack.c.bf16 %v1345, %v1344
      %v1359 = vpack.c.bf16 %v1347, %v1346
      %v1360 = vpack.c.bf16 %v1349, %v1348
      %v1361 = vpack.c.bf16 %v1351, %v1350
      %v1362 = vpack.c.bf16 %v1353, %v1352
      %v1363 = vpack.c.bf16 %v1355, %v1354
      %v1372 = vunpack.c.l.b16 %v1356
      %v1373 = vunpack.c.h.b16 %v1356
      %v1374 = vunpack.c.l.b16 %v1357
      %v1375 = vunpack.c.h.b16 %v1357
      %v1376 = vunpack.c.l.b16 %v1358
      %v1377 = vunpack.c.h.b16 %v1358
      %v1378 = vunpack.c.l.b16 %v1359
      %v1379 = vunpack.c.h.b16 %v1359
      %v1380 = vunpack.c.l.b16 %v1360
      %v1381 = vunpack.c.h.b16 %v1360
      %v1382 = vunpack.c.l.b16 %v1361
      %v1383 = vunpack.c.h.b16 %v1361
      %v1384 = vunpack.c.l.b16 %v1362
      %v1385 = vunpack.c.h.b16 %v1362
      %v1386 = vunpack.c.l.b16 %v1363
      %v1387 = vunpack.c.h.b16 %v1363
      %v1388 = vpack.c.b16 %v1372, %v1372
      %v1389 = vpack.c.b16 %v1373, %v1373
      %v1390 = vpack.c.b16 %v1374, %v1374
      %v1391 = vpack.c.b16 %v1375, %v1375
      %v1392 = vpack.c.b16 %v1376, %v1376
      %v1393 = vpack.c.b16 %v1377, %v1377
      %v1394 = vpack.c.b16 %v1378, %v1378
      %v1395 = vpack.c.b16 %v1379, %v1379
      %v1396 = vpack.c.b16 %v1380, %v1380
      %v1397 = vpack.c.b16 %v1381, %v1381
      %v1398 = vpack.c.b16 %v1382, %v1382
      %v1399 = vpack.c.b16 %v1383, %v1383
      %v1400 = vpack.c.b16 %v1384, %v1384
      %v1401 = vpack.c.b16 %v1385, %v1385
      %v1402 = vpack.c.b16 %v1386, %v1386
      %v1403 = vpack.c.b16 %v1387, %v1387
      %vm1420 = vcmask 125952
      %1421 = vst.msk [vmem:[%s303] sm:$0xf] %vm1420, %v1388
      %1422 = vst.msk [vmem:[%s303 + $0x4] sm:$0xf] %vm1420, %v1389
      %1423 = vst.msk [vmem:[%s303 + $0x8] sm:$0xf] %vm1420, %v1390
      %1424 = vst.msk [vmem:[%s303 + $0xc] sm:$0xf] %vm1420, %v1391
      %1425 = vst.msk [vmem:[%s303 + $0x10] sm:$0xf] %vm1420, %v1392
      %1426 = vst.msk [vmem:[%s303 + $0x14] sm:$0xf] %vm1420, %v1393
      %1427 = vst.msk [vmem:[%s303 + $0x18] sm:$0xf] %vm1420, %v1394
      %1428 = vst.msk [vmem:[%s303 + $0x1c] sm:$0xf] %vm1420, %v1395
      %1429 = vst.msk [vmem:[%s303 + $0x20] sm:$0xf] %vm1420, %v1396
      %1430 = vst.msk [vmem:[%s303 + $0x24] sm:$0xf] %vm1420, %v1397
      %1431 = vst.msk [vmem:[%s303 + $0x28] sm:$0xf] %vm1420, %v1398
      %1432 = vst.msk [vmem:[%s303 + $0x2c] sm:$0xf] %vm1420, %v1399
      %1433 = vst.msk [vmem:[%s303 + $0x30] sm:$0xf] %vm1420, %v1400
      %1434 = vst.msk [vmem:[%s303 + $0x34] sm:$0xf] %vm1420, %v1401
      %1435 = vst.msk [vmem:[%s303 + $0x38] sm:$0xf] %vm1420, %v1402
      %1436 = vst.msk [vmem:[%s303 + $0x3c] sm:$0xf] %vm1420, %v1403
      %s1437 = smul.u32 16, %s19
      %p1438 = scmp.lt.s32.totalorder %s1437, 63
      %s1439 = scalar_select %p1438, %s1437, 63
      %s1440 = smul.addr %s1439, 4
      %s1441 = scalar_lea.vmem %s7, %s1440
      // Predicated region
      $region49: #{multi_scale_spatial_attention.3} parent=47 // pred_check
        %p1442 = pneg %p194
      $region50: #{multi_scale_spatial_attention.3} parent=47 // pred_check_branch
        %1444 = sbr.rel (%p1442) target = $region52
      $region51: #{multi_scale_spatial_attention.3} parent=47 // pred_region
        %s1445 = smul.u32 16, %s19
      $region52: #{multi_scale_spatial_attention.3} parent=47 // pred_fallthru
        _
    $region48: #{multi_scale_spatial_attention.3} parent=5 // pred_fallthru
      _
    %p1446 = scmp.le.s32.totalorder 2, %s14
    // Predicated region
    $region53: #{multi_scale_spatial_attention.3} parent=5 // pred_check
      %p1447 = pneg %p1446
    $region54: #{multi_scale_spatial_attention.3} parent=5 // pred_check_branch
      %1449 = sbr.rel (%p1447) target = $region56
    $region55: #{multi_scale_spatial_attention.3} parent=5 // pred_region
      %s1450 = ssub.s32 %s14, 2
      // Predicated region
      $region57: #{multi_scale_spatial_attention.3} parent=55 // pred_check
        %p1451 = pneg %p200
      $region58: #{multi_scale_spatial_attention.3} parent=55 // pred_check_branch
        %1453 = sbr.rel (%p1451) target = $region60
      $region59: #{multi_scale_spatial_attention.3} parent=55 // pred_region
        %s1454 = smul.u32 16, %s20
        %p1455 = scmp.lt.s32.totalorder %s1454, 63
        %s1456 = scalar_select %p1455, %s1454, 63
        %s1457 = smul.addr %s1456, 4
        %s1458 = scalar_lea.vmem %s7, %s1457
      $region60: #{multi_scale_spatial_attention.3} parent=55 // pred_fallthru
        _
    $region56: #{multi_scale_spatial_attention.3} parent=5 // pred_fallthru
      _
  $region6: #{multi_scale_spatial_attention.3} parent=0 // loop_footer
    %s18 = sadd.s32 1, %s14
  $region7: #{multi_scale_spatial_attention.3} parent=0 // loop_footer_branch
    %13 = sbr.rel target = $region3
  $region8: #{multi_scale_spatial_attention.3} parent=0 // loop_exit
    _

</llo_original>
